<compile_context>
chip_gen: v6e
topology: v6e:2x2x1
jax: 0.10.0
libtpu: 0.0.40
codegen_flags: <defaults>
</compile_context>

<pallas_src>
import functools

import jax
import jax.numpy as jnp
from jax.experimental import pallas as pl
from jax.experimental.pallas import tpu as pltpu


def _residual_block_kernel(x_ref, w1_ref, w2_ref, col_ref, row_ref, o_ref,
                           *, H, W, C):
    HW = H * W
    x = x_ref[0]                       # (C, HW) float32, lane-dense

    col = col_ref[...]                 # (C, HW) int32: w index of each lane
    row = row_ref[...]                 # (C, HW) int32: h index of each lane
    col_first = col == 0
    col_last = col == (W - 1)
    row_first = row == 0
    row_last = row == (H - 1)

    def cyc(a2, k):
        # a2 = [a | a] along the lane axis; returns s with
        #   s[:, j] = a[:, (j + k) % HW]        (k is a static Python int)
        return a2[:, k:k + HW]

    def conv3x3(a, w_taps_ref):
        # Tap (dy, dx) needs window[ci, (h, w)] = a[ci, refl(h+dy), refl(w+dx)].
        # Vertical and horizontal reflection are independent, so each is a
        # cyclic shift of the flattened image plus a boundary select.
        a2 = jnp.concatenate([a, a], axis=-1)
        acc = jnp.zeros((C, HW), jnp.float32)
        for dy in (-1, 0, 1):
            if dy == 0:
                av, av2 = a, a2
            else:
                fwd = cyc(a2, (dy * W) % HW)          # value from row h + dy
                bwd = cyc(a2, (-dy * W) % HW)         # reflected source row
                av = jnp.where(row_last if dy > 0 else row_first, bwd, fwd)
                av2 = jnp.concatenate([av, av], axis=-1)
            for dx in (-1, 0, 1):
                if dx == 0:
                    win = av
                else:
                    fwd = cyc(av2, dx % HW)           # value from column w + dx
                    bwd = cyc(av2, (-dx) % HW)        # reflected source column
                    win = jnp.where(col_last if dx > 0 else col_first, bwd, fwd)
                tap = (dy + 1) * 3 + (dx + 1)
                acc = acc + jnp.dot(w_taps_ref[tap], win.astype(jnp.bfloat16),
                                    preferred_element_type=jnp.float32)
        return acc                                     # (C, HW) float32

    inv_hw = 1.0 / float(HW)

    def instance_norm(t):
        # Single-pass stats: var = E[x^2] - E[x]^2 (all f32), eps = 1e-5,
        # affine=False (PyTorch InstanceNorm2d defaults).
        mu = jnp.sum(t, axis=-1, keepdims=True) * inv_hw
        ex2 = jnp.sum(t * t, axis=-1, keepdims=True) * inv_hw
        var = ex2 - mu * mu
        return (t - mu) * jax.lax.rsqrt(var + 1e-5)

    h = jnp.maximum(instance_norm(conv3x3(x, w1_ref)), 0.0)   # ReLU
    h2 = instance_norm(conv3x3(h, w2_ref))
    o_ref[0] = (x + h2).astype(o_ref.dtype)                   # residual add


def residual_block(x_nchw, w1_oihw, w2_oihw):
    """Fused CycleGAN residual block.

    x_nchw : (N, C, H, W) float32 (PyTorch layout; only flattened, never
             transposed).
    w*_oihw: (C, C, 3, 3) float32 Conv2d weights (PyTorch OIHW).
    Conv biases are intentionally omitted: the affine-free InstanceNorm that
    follows each conv cancels a per-channel bias exactly.
    """
    N, C, H, W = x_nchw.shape
    assert H >= 2 and W >= 2, "ReflectionPad2d(1) needs H, W >= 2"
    HW = H * W
    x_flat = x_nchw.reshape(N, C, HW)

    def taps(w):  # (C_out, C_in, 3, 3) -> (9, C_out, C_in) bf16 MXU operand
        return jnp.transpose(w, (2, 3, 0, 1)).reshape(9, C, C).astype(jnp.bfloat16)

    lane = jax.lax.broadcasted_iota(jnp.int32, (C, HW), 1)
    col_ids = lane % W
    row_ids = lane // W

    kernel = functools.partial(_residual_block_kernel, H=H, W=W, C=C)
    out = pl.pallas_call(
        kernel,
        out_shape=jax.ShapeDtypeStruct((N, C, HW), x_nchw.dtype),
        grid_spec=pltpu.PrefetchScalarGridSpec(
            num_scalar_prefetch=0,
            grid=(N,),
            in_specs=[
                pl.BlockSpec((1, C, HW), lambda n: (n, 0, 0)),
                pl.BlockSpec((9, C, C), lambda n: (0, 0, 0)),
                pl.BlockSpec((9, C, C), lambda n: (0, 0, 0)),
                pl.BlockSpec((C, HW), lambda n: (0, 0)),
                pl.BlockSpec((C, HW), lambda n: (0, 0)),
            ],
            out_specs=pl.BlockSpec((1, C, HW), lambda n: (n, 0, 0)),
        ),
        compiler_params=pltpu.CompilerParams(
            dimension_semantics=("parallel",)),
    )(x_flat, taps(w1_oihw), taps(w2_oihw), col_ids, row_ids)
    return out.reshape(N, C, H, W)


def _reference_nchw(x, w1, b1, w2, b2):
    """Pure-JAX NCHW reference mirroring the PyTorch module (conv in bf16 like
    the kernel's MXU path, everything else in f32)."""
    def conv(t, w, b):
        tp = jnp.pad(t, ((0, 0), (0, 0), (1, 1), (1, 1)), mode="reflect")
        y = jax.lax.conv_general_dilated(
            tp.astype(jnp.bfloat16), w.astype(jnp.bfloat16),
            window_strides=(1, 1), padding="VALID",
            dimension_numbers=("NCHW", "OIHW", "NCHW"),
            preferred_element_type=jnp.float32)
        return y + b.reshape(1, -1, 1, 1)

    def inorm(t):
        mu = jnp.mean(t, axis=(2, 3), keepdims=True)
        var = jnp.mean(jnp.square(t - mu), axis=(2, 3), keepdims=True)
        return (t - mu) * jax.lax.rsqrt(var + 1e-5)

    h = jax.nn.relu(inorm(conv(x, w1, b1)))
    return x + inorm(conv(h, w2, b2))


if __name__ == "__main__":
    N, C, H, W = 2, 4, 16, 16   # module: ResidualBlock(in_features=C), NCHW

    key = jax.random.PRNGKey(0)
    kx, k1, k2, kb1, kb2 = jax.random.split(key, 5)

    fan_in = 9 * C
    x = jax.random.normal(kx, (N, C, H, W), dtype=jnp.float32)
    w1 = jax.random.normal(k1, (C, C, 3, 3), dtype=jnp.float32) / jnp.sqrt(fan_in)
    w2 = jax.random.normal(k2, (C, C, 3, 3), dtype=jnp.float32) / jnp.sqrt(fan_in)
    b1 = 0.01 * jax.random.normal(kb1, (C,), dtype=jnp.float32)
    b2 = 0.01 * jax.random.normal(kb2, (C,), dtype=jnp.float32)

    # Biases go only into the reference: the affine-free InstanceNorm right
    # after each conv cancels a per-channel bias, so the kernel skips it.
    out = residual_block(x, w1, w2)
    out = jax.block_until_ready(out)

    ref = _reference_nchw(x, w1, b1, w2, b2)
    assert out.shape == (N, C, H, W)
    max_err = float(jnp.max(jnp.abs(out - ref)))
    # Tolerance sized for bf16 MXU operands (both kernel and reference use
    # bf16 convs with f32 accumulation; remaining diff is summation order).
    assert jnp.allclose(out, ref, atol=2e-2, rtol=2e-2), max_err

    print("KERNEL_OK")
</pallas_src>

<mosaic_0001>
module attributes {stable_mosaic.version = 11 : i64} {
  func.func @_residual_block_kernel(%arg0: i32, %arg1: memref<1x4x256xf32, #tpu.memory_space<vmem>>, %arg2: memref<9x4x4xbf16, #tpu.memory_space<vmem>>, %arg3: memref<9x4x4xbf16, #tpu.memory_space<vmem>>, %arg4: memref<4x256xi32, #tpu.memory_space<vmem>>, %arg5: memref<4x256xi32, #tpu.memory_space<vmem>>, %arg6: memref<1x4x256xf32, #tpu.memory_space<vmem>>) attributes {dimension_semantics = [#tpu.dimension_semantics<parallel>], iteration_bounds = array<i64: 2>, scalar_prefetch = 0 : i64, scratch_operands = 0 : i64, tpu.core_type = #tpu.core_type<tc>, window_params = [{transform_indices = @transform_0, window_bounds = array<i64: 1, 4, 256>}, {pipeline_mode = #tpu.pipeline_mode<synchronous>, transform_indices = @transform_1, window_bounds = array<i64: 9, 4, 4>}, {pipeline_mode = #tpu.pipeline_mode<synchronous>, transform_indices = @transform_2, window_bounds = array<i64: 9, 4, 4>}, {pipeline_mode = #tpu.pipeline_mode<synchronous>, transform_indices = @transform_3, window_bounds = array<i64: 4, 256>}, {pipeline_mode = #tpu.pipeline_mode<synchronous>, transform_indices = @transform_4, window_bounds = array<i64: 4, 256>}, {transform_indices = @transform_5, window_bounds = array<i64: 1, 4, 256>}]} {
    %c0 = arith.constant 0 : index
    %c0_0 = arith.constant 0 : index
    %c0_1 = arith.constant 0 : index
    %0 = vector.load %arg1[%c0, %c0_0, %c0_1] : memref<1x4x256xf32, #tpu.memory_space<vmem>>, vector<1x4x256xf32>
    %1 = vector.shape_cast %0 : vector<1x4x256xf32> to vector<4x256xf32>
    %c0_2 = arith.constant 0 : index
    %c0_3 = arith.constant 0 : index
    %2 = vector.load %arg4[%c0_2, %c0_3] : memref<4x256xi32, #tpu.memory_space<vmem>>, vector<4x256xi32>
    %c0_4 = arith.constant 0 : index
    %c0_5 = arith.constant 0 : index
    %3 = vector.load %arg5[%c0_4, %c0_5] : memref<4x256xi32, #tpu.memory_space<vmem>>, vector<4x256xi32>
    %c0_i32 = arith.constant 0 : i32
    %4 = vector.broadcast %c0_i32 : i32 to vector<4x256xi32>
    %5 = arith.cmpi eq, %2, %4 : vector<4x256xi32>
    %c15_i32 = arith.constant 15 : i32
    %6 = vector.broadcast %c15_i32 : i32 to vector<4x256xi32>
    %7 = arith.cmpi eq, %2, %6 : vector<4x256xi32>
    %c0_i32_6 = arith.constant 0 : i32
    %8 = vector.broadcast %c0_i32_6 : i32 to vector<4x256xi32>
    %9 = arith.cmpi eq, %3, %8 : vector<4x256xi32>
    %c15_i32_7 = arith.constant 15 : i32
    %10 = vector.broadcast %c15_i32_7 : i32 to vector<4x256xi32>
    %11 = arith.cmpi eq, %3, %10 : vector<4x256xi32>
    %12 = tpu.concatenate %1, %1 in 1 : vector<4x256xf32>, vector<4x256xf32> -> vector<4x512xf32>
    %cst = arith.constant 0.000000e+00 : f32
    %13 = vector.broadcast %cst : f32 to vector<4x256xf32>
    %14 = vector.extract_strided_slice %12 {offsets = [0, 240], sizes = [4, 256], strides = [1, 1]} : vector<4x512xf32> to vector<4x256xf32>
    %15 = vector.extract_strided_slice %12 {offsets = [0, 16], sizes = [4, 256], strides = [1, 1]} : vector<4x512xf32> to vector<4x256xf32>
    %16 = arith.select %9, %15, %14 : vector<4x256xi1>, vector<4x256xf32>
    %17 = tpu.concatenate %16, %16 in 1 : vector<4x256xf32>, vector<4x256xf32> -> vector<4x512xf32>
    %18 = vector.extract_strided_slice %17 {offsets = [0, 255], sizes = [4, 256], strides = [1, 1]} : vector<4x512xf32> to vector<4x256xf32>
    %19 = vector.extract_strided_slice %17 {offsets = [0, 1], sizes = [4, 256], strides = [1, 1]} : vector<4x512xf32> to vector<4x256xf32>
    %20 = arith.select %5, %19, %18 : vector<4x256xi1>, vector<4x256xf32>
    %c0_8 = arith.constant 0 : index
    %c0_9 = arith.constant 0 : index
    %c0_10 = arith.constant 0 : index
    %21 = vector.load %arg2[%c0_8, %c0_9, %c0_10] : memref<9x4x4xbf16, #tpu.memory_space<vmem>>, vector<1x4x4xbf16>
    %22 = vector.shape_cast %21 : vector<1x4x4xbf16> to vector<4x4xbf16>
    %23 = arith.truncf %20 : vector<4x256xf32> to vector<4x256xbf16>
    %cst_11 = arith.constant dense<0.000000e+00> : vector<4x256xf32>
    %24 = tpu.matmul %22, %23, %cst_11 {dimension_numbers = #tpu.dot_dimension_numbers<[1], [0], [0], [1], [0, 0, 1, 1], [], []>} : vector<4x4xbf16>, vector<4x256xbf16>, vector<4x256xf32> -> vector<4x256xf32>
    %25 = arith.addf %13, %24 : vector<4x256xf32>
    %c1 = arith.constant 1 : index
    %c0_12 = arith.constant 0 : index
    %c0_13 = arith.constant 0 : index
    %26 = vector.load %arg2[%c1, %c0_12, %c0_13] : memref<9x4x4xbf16, #tpu.memory_space<vmem>>, vector<1x4x4xbf16>
    %27 = vector.shape_cast %26 : vector<1x4x4xbf16> to vector<4x4xbf16>
    %28 = arith.truncf %16 : vector<4x256xf32> to vector<4x256xbf16>
    %cst_14 = arith.constant dense<0.000000e+00> : vector<4x256xf32>
    %29 = tpu.matmul %27, %28, %cst_14 {dimension_numbers = #tpu.dot_dimension_numbers<[1], [0], [0], [1], [0, 0, 1, 1], [], []>} : vector<4x4xbf16>, vector<4x256xbf16>, vector<4x256xf32> -> vector<4x256xf32>
    %30 = arith.addf %25, %29 : vector<4x256xf32>
    %31 = vector.extract_strided_slice %17 {offsets = [0, 1], sizes = [4, 256], strides = [1, 1]} : vector<4x512xf32> to vector<4x256xf32>
    %32 = vector.extract_strided_slice %17 {offsets = [0, 255], sizes = [4, 256], strides = [1, 1]} : vector<4x512xf32> to vector<4x256xf32>
    %33 = arith.select %7, %32, %31 : vector<4x256xi1>, vector<4x256xf32>
    %c2 = arith.constant 2 : index
    %c0_15 = arith.constant 0 : index
    %c0_16 = arith.constant 0 : index
    %34 = vector.load %arg2[%c2, %c0_15, %c0_16] : memref<9x4x4xbf16, #tpu.memory_space<vmem>>, vector<1x4x4xbf16>
    %35 = vector.shape_cast %34 : vector<1x4x4xbf16> to vector<4x4xbf16>
    %36 = arith.truncf %33 : vector<4x256xf32> to vector<4x256xbf16>
    %cst_17 = arith.constant dense<0.000000e+00> : vector<4x256xf32>
    %37 = tpu.matmul %35, %36, %cst_17 {dimension_numbers = #tpu.dot_dimension_numbers<[1], [0], [0], [1], [0, 0, 1, 1], [], []>} : vector<4x4xbf16>, vector<4x256xbf16>, vector<4x256xf32> -> vector<4x256xf32>
    %38 = arith.addf %30, %37 : vector<4x256xf32>
    %39 = vector.extract_strided_slice %12 {offsets = [0, 255], sizes = [4, 256], strides = [1, 1]} : vector<4x512xf32> to vector<4x256xf32>
    %40 = vector.extract_strided_slice %12 {offsets = [0, 1], sizes = [4, 256], strides = [1, 1]} : vector<4x512xf32> to vector<4x256xf32>
    %41 = arith.select %5, %40, %39 : vector<4x256xi1>, vector<4x256xf32>
    %c3 = arith.constant 3 : index
    %c0_18 = arith.constant 0 : index
    %c0_19 = arith.constant 0 : index
    %42 = vector.load %arg2[%c3, %c0_18, %c0_19] : memref<9x4x4xbf16, #tpu.memory_space<vmem>>, vector<1x4x4xbf16>
    %43 = vector.shape_cast %42 : vector<1x4x4xbf16> to vector<4x4xbf16>
    %44 = arith.truncf %41 : vector<4x256xf32> to vector<4x256xbf16>
    %cst_20 = arith.constant dense<0.000000e+00> : vector<4x256xf32>
    %45 = tpu.matmul %43, %44, %cst_20 {dimension_numbers = #tpu.dot_dimension_numbers<[1], [0], [0], [1], [0, 0, 1, 1], [], []>} : vector<4x4xbf16>, vector<4x256xbf16>, vector<4x256xf32> -> vector<4x256xf32>
    %46 = arith.addf %38, %45 : vector<4x256xf32>
    %c4 = arith.constant 4 : index
    %c0_21 = arith.constant 0 : index
    %c0_22 = arith.constant 0 : index
    %47 = vector.load %arg2[%c4, %c0_21, %c0_22] : memref<9x4x4xbf16, #tpu.memory_space<vmem>>, vector<1x4x4xbf16>
    %48 = vector.shape_cast %47 : vector<1x4x4xbf16> to vector<4x4xbf16>
    %49 = arith.truncf %1 : vector<4x256xf32> to vector<4x256xbf16>
    %cst_23 = arith.constant dense<0.000000e+00> : vector<4x256xf32>
    %50 = tpu.matmul %48, %49, %cst_23 {dimension_numbers = #tpu.dot_dimension_numbers<[1], [0], [0], [1], [0, 0, 1, 1], [], []>} : vector<4x4xbf16>, vector<4x256xbf16>, vector<4x256xf32> -> vector<4x256xf32>
    %51 = arith.addf %46, %50 : vector<4x256xf32>
    %52 = vector.extract_strided_slice %12 {offsets = [0, 1], sizes = [4, 256], strides = [1, 1]} : vector<4x512xf32> to vector<4x256xf32>
    %53 = vector.extract_strided_slice %12 {offsets = [0, 255], sizes = [4, 256], strides = [1, 1]} : vector<4x512xf32> to vector<4x256xf32>
    %54 = arith.select %7, %53, %52 : vector<4x256xi1>, vector<4x256xf32>
    %c5 = arith.constant 5 : index
    %c0_24 = arith.constant 0 : index
    %c0_25 = arith.constant 0 : index
    %55 = vector.load %arg2[%c5, %c0_24, %c0_25] : memref<9x4x4xbf16, #tpu.memory_space<vmem>>, vector<1x4x4xbf16>
    %56 = vector.shape_cast %55 : vector<1x4x4xbf16> to vector<4x4xbf16>
    %57 = arith.truncf %54 : vector<4x256xf32> to vector<4x256xbf16>
    %cst_26 = arith.constant dense<0.000000e+00> : vector<4x256xf32>
    %58 = tpu.matmul %56, %57, %cst_26 {dimension_numbers = #tpu.dot_dimension_numbers<[1], [0], [0], [1], [0, 0, 1, 1], [], []>} : vector<4x4xbf16>, vector<4x256xbf16>, vector<4x256xf32> -> vector<4x256xf32>
    %59 = arith.addf %51, %58 : vector<4x256xf32>
    %60 = vector.extract_strided_slice %12 {offsets = [0, 16], sizes = [4, 256], strides = [1, 1]} : vector<4x512xf32> to vector<4x256xf32>
    %61 = vector.extract_strided_slice %12 {offsets = [0, 240], sizes = [4, 256], strides = [1, 1]} : vector<4x512xf32> to vector<4x256xf32>
    %62 = arith.select %11, %61, %60 : vector<4x256xi1>, vector<4x256xf32>
    %63 = tpu.concatenate %62, %62 in 1 : vector<4x256xf32>, vector<4x256xf32> -> vector<4x512xf32>
    %64 = vector.extract_strided_slice %63 {offsets = [0, 255], sizes = [4, 256], strides = [1, 1]} : vector<4x512xf32> to vector<4x256xf32>
    %65 = vector.extract_strided_slice %63 {offsets = [0, 1], sizes = [4, 256], strides = [1, 1]} : vector<4x512xf32> to vector<4x256xf32>
    %66 = arith.select %5, %65, %64 : vector<4x256xi1>, vector<4x256xf32>
    %c6 = arith.constant 6 : index
    %c0_27 = arith.constant 0 : index
    %c0_28 = arith.constant 0 : index
    %67 = vector.load %arg2[%c6, %c0_27, %c0_28] : memref<9x4x4xbf16, #tpu.memory_space<vmem>>, vector<1x4x4xbf16>
    %68 = vector.shape_cast %67 : vector<1x4x4xbf16> to vector<4x4xbf16>
    %69 = arith.truncf %66 : vector<4x256xf32> to vector<4x256xbf16>
    %cst_29 = arith.constant dense<0.000000e+00> : vector<4x256xf32>
    %70 = tpu.matmul %68, %69, %cst_29 {dimension_numbers = #tpu.dot_dimension_numbers<[1], [0], [0], [1], [0, 0, 1, 1], [], []>} : vector<4x4xbf16>, vector<4x256xbf16>, vector<4x256xf32> -> vector<4x256xf32>
    %71 = arith.addf %59, %70 : vector<4x256xf32>
    %c7 = arith.constant 7 : index
    %c0_30 = arith.constant 0 : index
    %c0_31 = arith.constant 0 : index
    %72 = vector.load %arg2[%c7, %c0_30, %c0_31] : memref<9x4x4xbf16, #tpu.memory_space<vmem>>, vector<1x4x4xbf16>
    %73 = vector.shape_cast %72 : vector<1x4x4xbf16> to vector<4x4xbf16>
    %74 = arith.truncf %62 : vector<4x256xf32> to vector<4x256xbf16>
    %cst_32 = arith.constant dense<0.000000e+00> : vector<4x256xf32>
    %75 = tpu.matmul %73, %74, %cst_32 {dimension_numbers = #tpu.dot_dimension_numbers<[1], [0], [0], [1], [0, 0, 1, 1], [], []>} : vector<4x4xbf16>, vector<4x256xbf16>, vector<4x256xf32> -> vector<4x256xf32>
    %76 = arith.addf %71, %75 : vector<4x256xf32>
    %77 = vector.extract_strided_slice %63 {offsets = [0, 1], sizes = [4, 256], strides = [1, 1]} : vector<4x512xf32> to vector<4x256xf32>
    %78 = vector.extract_strided_slice %63 {offsets = [0, 255], sizes = [4, 256], strides = [1, 1]} : vector<4x512xf32> to vector<4x256xf32>
    %79 = arith.select %7, %78, %77 : vector<4x256xi1>, vector<4x256xf32>
    %c8 = arith.constant 8 : index
    %c0_33 = arith.constant 0 : index
    %c0_34 = arith.constant 0 : index
    %80 = vector.load %arg2[%c8, %c0_33, %c0_34] : memref<9x4x4xbf16, #tpu.memory_space<vmem>>, vector<1x4x4xbf16>
    %81 = vector.shape_cast %80 : vector<1x4x4xbf16> to vector<4x4xbf16>
    %82 = arith.truncf %79 : vector<4x256xf32> to vector<4x256xbf16>
    %cst_35 = arith.constant dense<0.000000e+00> : vector<4x256xf32>
    %83 = tpu.matmul %81, %82, %cst_35 {dimension_numbers = #tpu.dot_dimension_numbers<[1], [0], [0], [1], [0, 0, 1, 1], [], []>} : vector<4x4xbf16>, vector<4x256xbf16>, vector<4x256xf32> -> vector<4x256xf32>
    %84 = arith.addf %76, %83 : vector<4x256xf32>
    %cst_36 = arith.constant dense<0.000000e+00> : vector<4xf32>
    %85 = vector.multi_reduction <add>, %84, %cst_36 [1] : vector<4x256xf32> to vector<4xf32>
    %86 = vector.shape_cast %85 : vector<4xf32> to vector<4x1xf32>
    %cst_37 = arith.constant 3.906250e-03 : f32
    %87 = vector.broadcast %cst_37 : f32 to vector<4x1xf32>
    %88 = arith.mulf %86, %87 : vector<4x1xf32>
    %89 = arith.mulf %84, %84 : vector<4x256xf32>
    %cst_38 = arith.constant dense<0.000000e+00> : vector<4xf32>
    %90 = vector.multi_reduction <add>, %89, %cst_38 [1] : vector<4x256xf32> to vector<4xf32>
    %91 = vector.shape_cast %90 : vector<4xf32> to vector<4x1xf32>
    %cst_39 = arith.constant 3.906250e-03 : f32
    %92 = vector.broadcast %cst_39 : f32 to vector<4x1xf32>
    %93 = arith.mulf %91, %92 : vector<4x1xf32>
    %94 = arith.mulf %88, %88 : vector<4x1xf32>
    %95 = arith.subf %93, %94 : vector<4x1xf32>
    %96 = vector.broadcast %88 : vector<4x1xf32> to vector<4x256xf32>
    %97 = arith.subf %84, %96 : vector<4x256xf32>
    %cst_40 = arith.constant 9.99999974E-6 : f32
    %98 = vector.broadcast %cst_40 : f32 to vector<4x1xf32>
    %99 = arith.addf %95, %98 : vector<4x1xf32>
    %100 = math.rsqrt %99 : vector<4x1xf32>
    %101 = vector.broadcast %100 : vector<4x1xf32> to vector<4x256xf32>
    %102 = arith.mulf %97, %101 : vector<4x256xf32>
    %cst_41 = arith.constant 0.000000e+00 : f32
    %103 = vector.broadcast %cst_41 : f32 to vector<4x256xf32>
    %104 = arith.maximumf %102, %103 : vector<4x256xf32>
    %105 = tpu.concatenate %104, %104 in 1 : vector<4x256xf32>, vector<4x256xf32> -> vector<4x512xf32>
    %cst_42 = arith.constant 0.000000e+00 : f32
    %106 = vector.broadcast %cst_42 : f32 to vector<4x256xf32>
    %107 = vector.extract_strided_slice %105 {offsets = [0, 240], sizes = [4, 256], strides = [1, 1]} : vector<4x512xf32> to vector<4x256xf32>
    %108 = vector.extract_strided_slice %105 {offsets = [0, 16], sizes = [4, 256], strides = [1, 1]} : vector<4x512xf32> to vector<4x256xf32>
    %109 = arith.select %9, %108, %107 : vector<4x256xi1>, vector<4x256xf32>
    %110 = tpu.concatenate %109, %109 in 1 : vector<4x256xf32>, vector<4x256xf32> -> vector<4x512xf32>
    %111 = vector.extract_strided_slice %110 {offsets = [0, 255], sizes = [4, 256], strides = [1, 1]} : vector<4x512xf32> to vector<4x256xf32>
    %112 = vector.extract_strided_slice %110 {offsets = [0, 1], sizes = [4, 256], strides = [1, 1]} : vector<4x512xf32> to vector<4x256xf32>
    %113 = arith.select %5, %112, %111 : vector<4x256xi1>, vector<4x256xf32>
    %c0_43 = arith.constant 0 : index
    %c0_44 = arith.constant 0 : index
    %c0_45 = arith.constant 0 : index
    %114 = vector.load %arg3[%c0_43, %c0_44, %c0_45] : memref<9x4x4xbf16, #tpu.memory_space<vmem>>, vector<1x4x4xbf16>
    %115 = vector.shape_cast %114 : vector<1x4x4xbf16> to vector<4x4xbf16>
    %116 = arith.truncf %113 : vector<4x256xf32> to vector<4x256xbf16>
    %cst_46 = arith.constant dense<0.000000e+00> : vector<4x256xf32>
    %117 = tpu.matmul %115, %116, %cst_46 {dimension_numbers = #tpu.dot_dimension_numbers<[1], [0], [0], [1], [0, 0, 1, 1], [], []>} : vector<4x4xbf16>, vector<4x256xbf16>, vector<4x256xf32> -> vector<4x256xf32>
    %118 = arith.addf %106, %117 : vector<4x256xf32>
    %c1_47 = arith.constant 1 : index
    %c0_48 = arith.constant 0 : index
    %c0_49 = arith.constant 0 : index
    %119 = vector.load %arg3[%c1_47, %c0_48, %c0_49] : memref<9x4x4xbf16, #tpu.memory_space<vmem>>, vector<1x4x4xbf16>
    %120 = vector.shape_cast %119 : vector<1x4x4xbf16> to vector<4x4xbf16>
    %121 = arith.truncf %109 : vector<4x256xf32> to vector<4x256xbf16>
    %cst_50 = arith.constant dense<0.000000e+00> : vector<4x256xf32>
    %122 = tpu.matmul %120, %121, %cst_50 {dimension_numbers = #tpu.dot_dimension_numbers<[1], [0], [0], [1], [0, 0, 1, 1], [], []>} : vector<4x4xbf16>, vector<4x256xbf16>, vector<4x256xf32> -> vector<4x256xf32>
    %123 = arith.addf %118, %122 : vector<4x256xf32>
    %124 = vector.extract_strided_slice %110 {offsets = [0, 1], sizes = [4, 256], strides = [1, 1]} : vector<4x512xf32> to vector<4x256xf32>
    %125 = vector.extract_strided_slice %110 {offsets = [0, 255], sizes = [4, 256], strides = [1, 1]} : vector<4x512xf32> to vector<4x256xf32>
    %126 = arith.select %7, %125, %124 : vector<4x256xi1>, vector<4x256xf32>
    %c2_51 = arith.constant 2 : index
    %c0_52 = arith.constant 0 : index
    %c0_53 = arith.constant 0 : index
    %127 = vector.load %arg3[%c2_51, %c0_52, %c0_53] : memref<9x4x4xbf16, #tpu.memory_space<vmem>>, vector<1x4x4xbf16>
    %128 = vector.shape_cast %127 : vector<1x4x4xbf16> to vector<4x4xbf16>
    %129 = arith.truncf %126 : vector<4x256xf32> to vector<4x256xbf16>
    %cst_54 = arith.constant dense<0.000000e+00> : vector<4x256xf32>
    %130 = tpu.matmul %128, %129, %cst_54 {dimension_numbers = #tpu.dot_dimension_numbers<[1], [0], [0], [1], [0, 0, 1, 1], [], []>} : vector<4x4xbf16>, vector<4x256xbf16>, vector<4x256xf32> -> vector<4x256xf32>
    %131 = arith.addf %123, %130 : vector<4x256xf32>
    %132 = vector.extract_strided_slice %105 {offsets = [0, 255], sizes = [4, 256], strides = [1, 1]} : vector<4x512xf32> to vector<4x256xf32>
    %133 = vector.extract_strided_slice %105 {offsets = [0, 1], sizes = [4, 256], strides = [1, 1]} : vector<4x512xf32> to vector<4x256xf32>
    %134 = arith.select %5, %133, %132 : vector<4x256xi1>, vector<4x256xf32>
    %c3_55 = arith.constant 3 : index
    %c0_56 = arith.constant 0 : index
    %c0_57 = arith.constant 0 : index
    %135 = vector.load %arg3[%c3_55, %c0_56, %c0_57] : memref<9x4x4xbf16, #tpu.memory_space<vmem>>, vector<1x4x4xbf16>
    %136 = vector.shape_cast %135 : vector<1x4x4xbf16> to vector<4x4xbf16>
    %137 = arith.truncf %134 : vector<4x256xf32> to vector<4x256xbf16>
    %cst_58 = arith.constant dense<0.000000e+00> : vector<4x256xf32>
    %138 = tpu.matmul %136, %137, %cst_58 {dimension_numbers = #tpu.dot_dimension_numbers<[1], [0], [0], [1], [0, 0, 1, 1], [], []>} : vector<4x4xbf16>, vector<4x256xbf16>, vector<4x256xf32> -> vector<4x256xf32>
    %139 = arith.addf %131, %138 : vector<4x256xf32>
    %c4_59 = arith.constant 4 : index
    %c0_60 = arith.constant 0 : index
    %c0_61 = arith.constant 0 : index
    %140 = vector.load %arg3[%c4_59, %c0_60, %c0_61] : memref<9x4x4xbf16, #tpu.memory_space<vmem>>, vector<1x4x4xbf16>
    %141 = vector.shape_cast %140 : vector<1x4x4xbf16> to vector<4x4xbf16>
    %142 = arith.truncf %104 : vector<4x256xf32> to vector<4x256xbf16>
    %cst_62 = arith.constant dense<0.000000e+00> : vector<4x256xf32>
    %143 = tpu.matmul %141, %142, %cst_62 {dimension_numbers = #tpu.dot_dimension_numbers<[1], [0], [0], [1], [0, 0, 1, 1], [], []>} : vector<4x4xbf16>, vector<4x256xbf16>, vector<4x256xf32> -> vector<4x256xf32>
    %144 = arith.addf %139, %143 : vector<4x256xf32>
    %145 = vector.extract_strided_slice %105 {offsets = [0, 1], sizes = [4, 256], strides = [1, 1]} : vector<4x512xf32> to vector<4x256xf32>
    %146 = vector.extract_strided_slice %105 {offsets = [0, 255], sizes = [4, 256], strides = [1, 1]} : vector<4x512xf32> to vector<4x256xf32>
    %147 = arith.select %7, %146, %145 : vector<4x256xi1>, vector<4x256xf32>
    %c5_63 = arith.constant 5 : index
    %c0_64 = arith.constant 0 : index
    %c0_65 = arith.constant 0 : index
    %148 = vector.load %arg3[%c5_63, %c0_64, %c0_65] : memref<9x4x4xbf16, #tpu.memory_space<vmem>>, vector<1x4x4xbf16>
    %149 = vector.shape_cast %148 : vector<1x4x4xbf16> to vector<4x4xbf16>
    %150 = arith.truncf %147 : vector<4x256xf32> to vector<4x256xbf16>
    %cst_66 = arith.constant dense<0.000000e+00> : vector<4x256xf32>
    %151 = tpu.matmul %149, %150, %cst_66 {dimension_numbers = #tpu.dot_dimension_numbers<[1], [0], [0], [1], [0, 0, 1, 1], [], []>} : vector<4x4xbf16>, vector<4x256xbf16>, vector<4x256xf32> -> vector<4x256xf32>
    %152 = arith.addf %144, %151 : vector<4x256xf32>
    %153 = vector.extract_strided_slice %105 {offsets = [0, 16], sizes = [4, 256], strides = [1, 1]} : vector<4x512xf32> to vector<4x256xf32>
    %154 = vector.extract_strided_slice %105 {offsets = [0, 240], sizes = [4, 256], strides = [1, 1]} : vector<4x512xf32> to vector<4x256xf32>
    %155 = arith.select %11, %154, %153 : vector<4x256xi1>, vector<4x256xf32>
    %156 = tpu.concatenate %155, %155 in 1 : vector<4x256xf32>, vector<4x256xf32> -> vector<4x512xf32>
    %157 = vector.extract_strided_slice %156 {offsets = [0, 255], sizes = [4, 256], strides = [1, 1]} : vector<4x512xf32> to vector<4x256xf32>
    %158 = vector.extract_strided_slice %156 {offsets = [0, 1], sizes = [4, 256], strides = [1, 1]} : vector<4x512xf32> to vector<4x256xf32>
    %159 = arith.select %5, %158, %157 : vector<4x256xi1>, vector<4x256xf32>
    %c6_67 = arith.constant 6 : index
    %c0_68 = arith.constant 0 : index
    %c0_69 = arith.constant 0 : index
    %160 = vector.load %arg3[%c6_67, %c0_68, %c0_69] : memref<9x4x4xbf16, #tpu.memory_space<vmem>>, vector<1x4x4xbf16>
    %161 = vector.shape_cast %160 : vector<1x4x4xbf16> to vector<4x4xbf16>
    %162 = arith.truncf %159 : vector<4x256xf32> to vector<4x256xbf16>
    %cst_70 = arith.constant dense<0.000000e+00> : vector<4x256xf32>
    %163 = tpu.matmul %161, %162, %cst_70 {dimension_numbers = #tpu.dot_dimension_numbers<[1], [0], [0], [1], [0, 0, 1, 1], [], []>} : vector<4x4xbf16>, vector<4x256xbf16>, vector<4x256xf32> -> vector<4x256xf32>
    %164 = arith.addf %152, %163 : vector<4x256xf32>
    %c7_71 = arith.constant 7 : index
    %c0_72 = arith.constant 0 : index
    %c0_73 = arith.constant 0 : index
    %165 = vector.load %arg3[%c7_71, %c0_72, %c0_73] : memref<9x4x4xbf16, #tpu.memory_space<vmem>>, vector<1x4x4xbf16>
    %166 = vector.shape_cast %165 : vector<1x4x4xbf16> to vector<4x4xbf16>
    %167 = arith.truncf %155 : vector<4x256xf32> to vector<4x256xbf16>
    %cst_74 = arith.constant dense<0.000000e+00> : vector<4x256xf32>
    %168 = tpu.matmul %166, %167, %cst_74 {dimension_numbers = #tpu.dot_dimension_numbers<[1], [0], [0], [1], [0, 0, 1, 1], [], []>} : vector<4x4xbf16>, vector<4x256xbf16>, vector<4x256xf32> -> vector<4x256xf32>
    %169 = arith.addf %164, %168 : vector<4x256xf32>
    %170 = vector.extract_strided_slice %156 {offsets = [0, 1], sizes = [4, 256], strides = [1, 1]} : vector<4x512xf32> to vector<4x256xf32>
    %171 = vector.extract_strided_slice %156 {offsets = [0, 255], sizes = [4, 256], strides = [1, 1]} : vector<4x512xf32> to vector<4x256xf32>
    %172 = arith.select %7, %171, %170 : vector<4x256xi1>, vector<4x256xf32>
    %c8_75 = arith.constant 8 : index
    %c0_76 = arith.constant 0 : index
    %c0_77 = arith.constant 0 : index
    %173 = vector.load %arg3[%c8_75, %c0_76, %c0_77] : memref<9x4x4xbf16, #tpu.memory_space<vmem>>, vector<1x4x4xbf16>
    %174 = vector.shape_cast %173 : vector<1x4x4xbf16> to vector<4x4xbf16>
    %175 = arith.truncf %172 : vector<4x256xf32> to vector<4x256xbf16>
    %cst_78 = arith.constant dense<0.000000e+00> : vector<4x256xf32>
    %176 = tpu.matmul %174, %175, %cst_78 {dimension_numbers = #tpu.dot_dimension_numbers<[1], [0], [0], [1], [0, 0, 1, 1], [], []>} : vector<4x4xbf16>, vector<4x256xbf16>, vector<4x256xf32> -> vector<4x256xf32>
    %177 = arith.addf %169, %176 : vector<4x256xf32>
    %cst_79 = arith.constant dense<0.000000e+00> : vector<4xf32>
    %178 = vector.multi_reduction <add>, %177, %cst_79 [1] : vector<4x256xf32> to vector<4xf32>
    %179 = vector.shape_cast %178 : vector<4xf32> to vector<4x1xf32>
    %cst_80 = arith.constant 3.906250e-03 : f32
    %180 = vector.broadcast %cst_80 : f32 to vector<4x1xf32>
    %181 = arith.mulf %179, %180 : vector<4x1xf32>
    %182 = arith.mulf %177, %177 : vector<4x256xf32>
    %cst_81 = arith.constant dense<0.000000e+00> : vector<4xf32>
    %183 = vector.multi_reduction <add>, %182, %cst_81 [1] : vector<4x256xf32> to vector<4xf32>
    %184 = vector.shape_cast %183 : vector<4xf32> to vector<4x1xf32>
    %cst_82 = arith.constant 3.906250e-03 : f32
    %185 = vector.broadcast %cst_82 : f32 to vector<4x1xf32>
    %186 = arith.mulf %184, %185 : vector<4x1xf32>
    %187 = arith.mulf %181, %181 : vector<4x1xf32>
    %188 = arith.subf %186, %187 : vector<4x1xf32>
    %189 = vector.broadcast %181 : vector<4x1xf32> to vector<4x256xf32>
    %190 = arith.subf %177, %189 : vector<4x256xf32>
    %cst_83 = arith.constant 9.99999974E-6 : f32
    %191 = vector.broadcast %cst_83 : f32 to vector<4x1xf32>
    %192 = arith.addf %188, %191 : vector<4x1xf32>
    %193 = math.rsqrt %192 : vector<4x1xf32>
    %194 = vector.broadcast %193 : vector<4x1xf32> to vector<4x256xf32>
    %195 = arith.mulf %190, %194 : vector<4x256xf32>
    %196 = arith.addf %1, %195 : vector<4x256xf32>
    %c0_84 = arith.constant 0 : index
    %c0_85 = arith.constant 0 : index
    %c0_86 = arith.constant 0 : index
    %197 = vector.load %arg6[%c0_84, %c0_85, %c0_86] : memref<1x4x256xf32, #tpu.memory_space<vmem>>, vector<1x4x256xf32>
    %198 = vector.shape_cast %197 : vector<1x4x256xf32> to vector<4x256xf32>
    %199 = vector.shape_cast %196 : vector<4x256xf32> to vector<1x4x256xf32>
    tpu.vector_store %arg6[%c0_84, %c0_85, %c0_86], %199 {strides = array<i32>} : memref<1x4x256xf32, #tpu.memory_space<vmem>>, vector<1x4x256xf32>,
    return
  }
  func.func @transform_0(%arg0: i32) -> (i32, i32, i32) {
    %c0_i32 = arith.constant 0 : i32
    %c0_i32_0 = arith.constant 0 : i32
    %c0_i32_1 = arith.constant 0 : i32
    return %arg0, %c0_i32, %c0_i32_0 : i32, i32, i32
  }
  func.func @transform_1(%arg0: i32) -> (i32, i32, i32) {
    %c0_i32 = arith.constant 0 : i32
    %c0_i32_0 = arith.constant 0 : i32
    %c0_i32_1 = arith.constant 0 : i32
    %c0_i32_2 = arith.constant 0 : i32
    return %c0_i32, %c0_i32_0, %c0_i32_1 : i32, i32, i32
  }
  func.func @transform_2(%arg0: i32) -> (i32, i32, i32) {
    %c0_i32 = arith.constant 0 : i32
    %c0_i32_0 = arith.constant 0 : i32
    %c0_i32_1 = arith.constant 0 : i32
    %c0_i32_2 = arith.constant 0 : i32
    return %c0_i32, %c0_i32_0, %c0_i32_1 : i32, i32, i32
  }
  func.func @transform_3(%arg0: i32) -> (i32, i32) {
    %c0_i32 = arith.constant 0 : i32
    %c0_i32_0 = arith.constant 0 : i32
    %c0_i32_1 = arith.constant 0 : i32
    return %c0_i32, %c0_i32_0 : i32, i32
  }
  func.func @transform_4(%arg0: i32) -> (i32, i32) {
    %c0_i32 = arith.constant 0 : i32
    %c0_i32_0 = arith.constant 0 : i32
    %c0_i32_1 = arith.constant 0 : i32
    return %c0_i32, %c0_i32_0 : i32, i32
  }
  func.func @transform_5(%arg0: i32) -> (i32, i32, i32) {
    %c0_i32 = arith.constant 0 : i32
    %c0_i32_0 = arith.constant 0 : i32
    %c0_i32_1 = arith.constant 0 : i32
    return %arg0, %c0_i32, %c0_i32_0 : i32, i32, i32
  }
}

</mosaic_0001>

<llo_original>
// kernel: tpu_custom_call.1
$region0: #{tpu_custom_call.1}
  #allocation0 [shape = 'u32[]', space=smem, size = 0x4, offset = 0x4, fixed_abs, tag = 'smem constant byte address 0x4 - core index']
  #allocation1 [shape = 'u32[144,128]{1,0:T(1,128)}', space=vmem, size = 0x12000, scoped, tag = 'internal scratch']
  %s0 = inlined_call_operand.vmem [shape: f32[2,4,256], index: 0, kind: input, shape index: {}]
  %s1 = inlined_call_operand.vmem [shape: bf16[9,4,4], index: 1, kind: input, shape index: {}]
  %s2 = inlined_call_operand.vmem [shape: bf16[9,4,4], index: 2, kind: input, shape index: {}]
  %s3 = inlined_call_operand.vmem [shape: s32[4,256], index: 3, kind: input, shape index: {}]
  %s4 = inlined_call_operand.vmem [shape: s32[4,256], index: 4, kind: input, shape index: {}]
  %s5 = inlined_call_operand.hbm [shape: f32[2,4,256], index: 5, kind: output, shape index: {}]
  %s6 = sld [smem:[#allocation0]]
  $region53: #{tpu_custom_call.1} parent=0
    _
  %s8 = ssub.s32 1, %s6
  %s9 = scalar_select 0, %s8, %s6
  $region1: #{tpu_custom_call.1} parent=0
    #allocation2 [shape = 'u8[8192]{0}', space=vmem, size = 0x2000, scoped, tag = 'output window, operand 0']
    #allocation3 [shape = 's32[2]{0}', space=sflag, size = 0x8, scoped, tag = 'scoped memory for tpu_custom_call.1']
    %10 = vsyncpa [#allocation3], 0
    %s11 = scalar_lea.sflag [#allocation3], 1
    %12 = vsyncpa %s11, 0
    loop: start=0, step=1, limit=4
    $region2: #{tpu_custom_call.1} parent=1 // loop_pre_header
      _
    $region3: #{tpu_custom_call.1} parent=1 // loop_header
      %s14 = sphi 0, %s18
      %p15 = scmp.ge.s32.totalorder %s14, 4
      %s24 = sphi 0, %s26
      %s27 = sphi 0, %s24
      %s28 = sphi 0, %s27
      %s44 = sphi 0, %s28
      %s48 = sphi 0, %s48
      %s50 = sphi 0, %s48
      %s51 = sphi 0, %s50
      %s65 = sphi 0, %s51
      %s69 = sphi 0, %s69
      %s71 = sphi 0, %s69
      %s72 = sphi 0, %s71
      %s86 = sphi 0, %s72
      %s90 = sphi 0, %s90
      %s92 = sphi 0, %s90
      %s93 = sphi 0, %s92
      %s107 = sphi 0, %s93
      %s111 = sphi 0, %s111
      %s113 = sphi 0, %s111
      %s114 = sphi 0, %s113
      %s128 = sphi 0, %s114
      %s134 = sphi 0, %s136
      %s137 = sphi 0, %s134
      %s138 = sphi 0, %s137
      %s154 = sphi 0, %s138
    $region4: #{tpu_custom_call.1} parent=1 // loop_header_branch
      %17 = sbr.rel (%p15) target = $region8
    $region5: #{tpu_custom_call.1} parent=1 // loop_body
      %s19 = ssub.s32 %s14, 1
      %s20 = ssub.s32 %s14, 2
      %s21 = sadd.s32 %s14, 1
      %s22 = ssub.s32 %s14, %s21
      %p23 = scmp.eq.s32.totalorder %s22, 0
      %s25 = sadd.s32 %s24, 1
      %s26 = scalar_select %p23, %s24, %s25
      %p29 = pneg %p23
      %p30 = scmp.eq.s32.totalorder %s14, 1
      %p31 = por %p29, %p30
      %p32 = scmp.ne.s32.totalorder %s24, %s27
      %p33 = scmp.eq.s32.totalorder %s14, 0
      %p34 = por %p32, %p33
      %p35 = scmp.ne.s32.totalorder %s24, %s27
      %p36 = scmp.eq.s32.totalorder %s19, 1
      %p37 = por %p35, %p36
      %p38 = scmp.ne.s32.totalorder %s27, %s28
      %p39 = scmp.eq.s32.totalorder %s19, 0
      %p40 = por %p38, %p39
      %p41 = scmp.ne.s32.totalorder %s27, %s28
      %p42 = scmp.eq.s32.totalorder %s20, 1
      %p43 = por %p41, %p42
      %p45 = scmp.ne.s32.totalorder %s28, %s44
      %p46 = scmp.eq.s32.totalorder %s20, 0
      %p47 = por %p45, %p46
      %s49 = sadd.s32 %s48, 1
      %p52 = scmp.eq.s32.totalorder %s14, 1
      %p53 = scmp.ne.s32.totalorder %s48, %s50
      %p54 = scmp.eq.s32.totalorder %s14, 0
      %p55 = por %p53, %p54
      %p56 = scmp.ne.s32.totalorder %s48, %s50
      %p57 = scmp.eq.s32.totalorder %s19, 1
      %p58 = por %p56, %p57
      %p59 = scmp.ne.s32.totalorder %s50, %s51
      %p60 = scmp.eq.s32.totalorder %s19, 0
      %p61 = por %p59, %p60
      %p62 = scmp.ne.s32.totalorder %s50, %s51
      %p63 = scmp.eq.s32.totalorder %s20, 1
      %p64 = por %p62, %p63
      %p66 = scmp.ne.s32.totalorder %s51, %s65
      %p67 = scmp.eq.s32.totalorder %s20, 0
      %p68 = por %p66, %p67
      %s70 = sadd.s32 %s69, 1
      %p73 = scmp.eq.s32.totalorder %s14, 1
      %p74 = scmp.ne.s32.totalorder %s69, %s71
      %p75 = scmp.eq.s32.totalorder %s14, 0
      %p76 = por %p74, %p75
      %p77 = scmp.ne.s32.totalorder %s69, %s71
      %p78 = scmp.eq.s32.totalorder %s19, 1
      %p79 = por %p77, %p78
      %p80 = scmp.ne.s32.totalorder %s71, %s72
      %p81 = scmp.eq.s32.totalorder %s19, 0
      %p82 = por %p80, %p81
      %p83 = scmp.ne.s32.totalorder %s71, %s72
      %p84 = scmp.eq.s32.totalorder %s20, 1
      %p85 = por %p83, %p84
      %p87 = scmp.ne.s32.totalorder %s72, %s86
      %p88 = scmp.eq.s32.totalorder %s20, 0
      %p89 = por %p87, %p88
      %s91 = sadd.s32 %s90, 1
      %p94 = scmp.eq.s32.totalorder %s14, 1
      %p95 = scmp.ne.s32.totalorder %s90, %s92
      %p96 = scmp.eq.s32.totalorder %s14, 0
      %p97 = por %p95, %p96
      %p98 = scmp.ne.s32.totalorder %s90, %s92
      %p99 = scmp.eq.s32.totalorder %s19, 1
      %p100 = por %p98, %p99
      %p101 = scmp.ne.s32.totalorder %s92, %s93
      %p102 = scmp.eq.s32.totalorder %s19, 0
      %p103 = por %p101, %p102
      %p104 = scmp.ne.s32.totalorder %s92, %s93
      %p105 = scmp.eq.s32.totalorder %s20, 1
      %p106 = por %p104, %p105
      %p108 = scmp.ne.s32.totalorder %s93, %s107
      %p109 = scmp.eq.s32.totalorder %s20, 0
      %p110 = por %p108, %p109
      %s112 = sadd.s32 %s111, 1
      %p115 = scmp.eq.s32.totalorder %s14, 1
      %p116 = scmp.ne.s32.totalorder %s111, %s113
      %p117 = scmp.eq.s32.totalorder %s14, 0
      %p118 = por %p116, %p117
      %p119 = scmp.ne.s32.totalorder %s111, %s113
      %p120 = scmp.eq.s32.totalorder %s19, 1
      %p121 = por %p119, %p120
      %p122 = scmp.ne.s32.totalorder %s113, %s114
      %p123 = scmp.eq.s32.totalorder %s19, 0
      %p124 = por %p122, %p123
      %p125 = scmp.ne.s32.totalorder %s113, %s114
      %p126 = scmp.eq.s32.totalorder %s20, 1
      %p127 = por %p125, %p126
      %p129 = scmp.ne.s32.totalorder %s114, %s128
      %p130 = scmp.eq.s32.totalorder %s20, 0
      %p131 = por %p129, %p130
      %s132 = ssub.s32 %s14, %s21
      %p133 = scmp.eq.s32.totalorder %s132, 0
      %s135 = sadd.s32 %s134, 1
      %s136 = scalar_select %p133, %s134, %s135
      %p139 = pneg %p133
      %p140 = scmp.eq.s32.totalorder %s14, 1
      %p141 = por %p139, %p140
      %p142 = scmp.ne.s32.totalorder %s134, %s137
      %p143 = scmp.eq.s32.totalorder %s14, 0
      %p144 = por %p142, %p143
      %p145 = scmp.ne.s32.totalorder %s134, %s137
      %p146 = scmp.eq.s32.totalorder %s19, 1
      %p147 = por %p145, %p146
      %p148 = scmp.ne.s32.totalorder %s137, %s138
      %p149 = scmp.eq.s32.totalorder %s19, 0
      %p150 = por %p148, %p149
      %p151 = scmp.ne.s32.totalorder %s137, %s138
      %p152 = scmp.eq.s32.totalorder %s20, 1
      %p153 = por %p151, %p152
      %p155 = scmp.ne.s32.totalorder %s138, %s154
      %p156 = scmp.eq.s32.totalorder %s20, 0
      %p157 = por %p155, %p156
      %p158 = scmp.le.s32.totalorder 1, %s14
      %p159 = scmp.lt.s32.totalorder %s14, 3
      %p160 = pnand %p158, %p159
      %p161 = pneg %p160
      // Predicated region
      $region9: #{tpu_custom_call.1} parent=5 // pred_check
        _
      $region10: #{tpu_custom_call.1} parent=5 // pred_check_branch
        %163 = sbr.rel (%p160) target = $region12
      $region11: #{tpu_custom_call.1} parent=5 // pred_region
        %s164 = ssub.s32 %s14, 1
        // Predicated region
        $region13: #{tpu_custom_call.1} parent=11 // pred_check
          %p165 = pneg %p61
        $region14: #{tpu_custom_call.1} parent=11 // pred_check_branch
          %167 = sbr.rel (%p165) target = $region16
        $region15: #{tpu_custom_call.1} parent=11 // pred_region
          _
        $region16: #{tpu_custom_call.1} parent=11 // pred_fallthru
          _
        // Predicated region
        $region17: #{tpu_custom_call.1} parent=11 // pred_check
          %p168 = pneg %p82
        $region18: #{tpu_custom_call.1} parent=11 // pred_check_branch
          %170 = sbr.rel (%p168) target = $region20
        $region19: #{tpu_custom_call.1} parent=11 // pred_region
          _
        $region20: #{tpu_custom_call.1} parent=11 // pred_fallthru
          _
        // Predicated region
        $region21: #{tpu_custom_call.1} parent=11 // pred_check
          %p171 = pneg %p103
        $region22: #{tpu_custom_call.1} parent=11 // pred_check_branch
          %173 = sbr.rel (%p171) target = $region24
        $region23: #{tpu_custom_call.1} parent=11 // pred_region
          _
        $region24: #{tpu_custom_call.1} parent=11 // pred_fallthru
          _
        // Predicated region
        $region25: #{tpu_custom_call.1} parent=11 // pred_check
          %p174 = pneg %p124
        $region26: #{tpu_custom_call.1} parent=11 // pred_check_branch
          %176 = sbr.rel (%p174) target = $region28
        $region27: #{tpu_custom_call.1} parent=11 // pred_region
          _
        $region28: #{tpu_custom_call.1} parent=11 // pred_fallthru
          _
      $region12: #{tpu_custom_call.1} parent=5 // pred_fallthru
        _
      %p177 = scmp.lt.s32.totalorder %s14, 2
      // Predicated region
      $region29: #{tpu_custom_call.1} parent=5 // pred_check
        %p178 = pneg %p177
      $region30: #{tpu_custom_call.1} parent=5 // pred_check_branch
        %180 = sbr.rel (%p178) target = $region32
      $region31: #{tpu_custom_call.1} parent=5 // pred_region
        // Predicated region
        $region33: #{tpu_custom_call.1} parent=31 // pred_check
          %p181 = pneg %p34
        $region34: #{tpu_custom_call.1} parent=31 // pred_check_branch
          %183 = sbr.rel (%p181) target = $region36
        $region35: #{tpu_custom_call.1} parent=31 // pred_region
          %p184 = scmp.lt.s32.totalorder %s14, 1
          %s185 = scalar_select %p184, %s14, 1
          %s186 = smul.addr %s185, 2
          %s187 = smul.addr %s186, 4
          %s188 = scalar_lea.vmem %s0, %s187
        $region36: #{tpu_custom_call.1} parent=31 // pred_fallthru
          _
      $region32: #{tpu_custom_call.1} parent=5 // pred_fallthru
        _
      %p189 = scmp.le.s32.totalorder 1, %s14
      %p190 = scmp.lt.s32.totalorder %s14, 3
      %p191 = pnand %p189, %p190
      %p192 = pneg %p191
      // Predicated region
      $region37: #{tpu_custom_call.1} parent=5 // pred_check
        _
      $region38: #{tpu_custom_call.1} parent=5 // pred_check_branch
        %194 = sbr.rel (%p191) target = $region40
      $region39: #{tpu_custom_call.1} parent=5 // pred_region
        %s195 = ssub.s32 %s14, 1
        %p196 = scmp.lt.s32.totalorder %s19, 1
        %s197 = scalar_select %p196, %s19, 1
        %s198 = smul.addr %s197, 2
        %s199 = smul.addr %s198, 4
        %s200 = scalar_lea.vmem %s0, %s199
        %p201 = pneg %p40
        %p202 = pneg %p37
        %p203 = pneg %p61
        %p204 = pneg %p58
        %p205 = pneg %p82
        %p206 = pneg %p79
        %p207 = pneg %p103
        %p208 = pneg %p100
        %p209 = pneg %p124
        %p210 = pneg %p121
        %p211 = pneg %p150
        %p212 = pneg %p147
        %s213 = sand.u32 %s137, 1
        %s214 = scalar_lea.sflag [#allocation3], %s213
        %s215 = sand.u32 %s137, 1
        %s216 = smul.addr %s215, 8
        %s217 = scalar_lea.vmem [#allocation2], %s216
        %p218 = scmp.lt.s32.totalorder %s19, 1
        %s219 = scalar_select %p218, %s19, 1
        %s220 = smul.addr %s219, 2
        %s221 = smul.addr %s220, 4
        %s222 = scalar_lea.vmem %s0, %s221
        %v224 = vld [vmem:[%s222] sm:$0xff]
        %v225 = vld [vmem:[%s3] sm:$0xff]
        %v226 = vld [vmem:[%s4] sm:$0xff]
        %vm227 = vcmp.eq.s32.totalorder %v225, 0
        %vm228 = vcmp.eq.s32.totalorder %v225, 15
        %vm229 = vcmp.eq.s32.totalorder %v226, 0
        %vm230 = vcmp.eq.s32.totalorder %v226, 15
        %v232 = vcombine.high %v224, %v224
        %v233 = vcombine.low %v224, %v232
        %234 = vrot.lane.b32.xlu0 %v233, 112
        %v235 = vpop.permute.xlu0 %234
        %236 = vrot.lane.b32.xlu0 %v224, 112
        %v237 = vpop.permute.xlu0 %236
        %v238 = vrot.slane %v235, 4
        %v239 = vrot.slane %v237, 4
        %vm240 = vcmask 1043456
        %v241 = vsel %vm240, %v238, %v239
        %vm242 = vcmask 916480
        %v243 = vsel %vm242, %v235, %v241
        %v245 = vcombine.low %v232, %v224
        %246 = vrot.lane.b32.xlu0 %v245, 16
        %v247 = vpop.permute.xlu0 %246
        %248 = vrot.lane.b32.xlu0 %v232, 16
        %v249 = vpop.permute.xlu0 %248
        %v250 = vrot.slane %v247, 4
        %v251 = vrot.slane %v249, 4
        %v252 = vsel %vm240, %v250, %v251
        %vm253 = vcmask 130048
        %v254 = vsel %vm253, %v247, %v252
        %v256 = vsel %vm229, %v243, %v254
        %v258 = vcombine.high %v256, %v256
        %v259 = vcombine.low %v256, %v258
        %260 = vrot.lane.b32.xlu0 %v259, 127
        %v261 = vpop.permute.xlu0 %260
        %262 = vrot.lane.b32.xlu0 %v256, 127
        %v263 = vpop.permute.xlu0 %262
        %v264 = vrot.slane %v261, 4
        %v265 = vrot.slane %v263, 4
        %v266 = vsel %vm240, %v264, %v265
        %vm267 = vcmask 1039360
        %v268 = vsel %vm267, %v261, %v266
        %v270 = vcombine.low %v258, %v256
        %271 = vrot.lane.b32.xlu0 %v270, 1
        %v272 = vpop.permute.xlu0 %271
        %273 = vrot.lane.b32.xlu0 %v258, 1
        %v274 = vpop.permute.xlu0 %273
        %v275 = vrot.slane %v272, 4
        %v276 = vrot.slane %v274, 4
        %v277 = vsel %vm240, %v275, %v276
        %vm278 = vcmask 7168
        %v279 = vsel %vm278, %v272, %v277
        %v281 = vsel %vm227, %v268, %v279
        %v282 = vld [vmem:[%s1] sm:$0x3]
        %v284 = vcombine.high %v281, %v281
        %v286 = vpack.c.bf16 %v281, %v281
        %v287 = vpack.c.bf16 %v284, %v284
        %s288 = scalar_lea.vmem %s1, 2
        %v289 = vld [vmem:[%s288] sm:$0x3]
        %v291 = vpack.c.bf16 %v256, %v256
        %v292 = vpack.c.bf16 %v258, %v258
        %vm293 = vcmask 31744
        %v295 = vsel %vm293, %v289, 0
        %vm297 = vcmask 1041408
        %v299 = vsel %vm297, %v291, 0
        %v302 = vsel %vm297, %v292, 0
        %304 = vmatprep.subr.bf16.mxu0 0
        %305 = vmatpush1.bf16.msra.mxu0 0
        %306 = vmatprep.subr.bf16.mxu0 0
        %307 = vmatpush1.bf16.msra.mxu0 0
        %308 = vmatprep.subr.bf16.mxu0 0
        %309 = vmatpush1.bf16.msra.mxu0 0
        %310 = vmatprep.subr.bf16.mxu0 0
        %311 = vmatpush1.bf16.msra.mxu0 0
        %312 = vmatprep.subr.bf16.mxu0 0
        %313 = vmatpush1.bf16.msra.mxu0 0
        %314 = vmatprep.subr.bf16.mxu0 0
        %315 = vmatpush1.bf16.msra.mxu0 0
        %316 = vmatprep.subr.bf16.mxu0 0
        %317 = vmatpush1.bf16.msra.mxu0 0
        %318 = vmatprep.subr.bf16.mxu0 %v302
        %319 = vmatpush1.bf16.msra.mxu0 %v299
        %320 = vmatprep.subr.bf16.mxu0 0
        %321 = vmatpush2.bf16.msra.mxu0 0
        %322 = vmatprep.subr.bf16.mxu0 0
        %323 = vmatpush2.bf16.msra.mxu0 0
        %324 = vmatprep.subr.bf16.mxu0 0
        %325 = vmatpush2.bf16.msra.mxu0 0
        %326 = vmatprep.subr.bf16.mxu0 0
        %327 = vmatpush2.bf16.msra.mxu0 0
        %328 = vmatprep.subr.bf16.mxu0 0
        %329 = vmatpush2.bf16.msra.mxu0 0
        %330 = vmatprep.subr.bf16.mxu0 0
        %331 = vmatpush2.bf16.msra.mxu0 0
        %332 = vmatprep.subr.bf16.mxu0 0
        %333 = vmatpush2.bf16.msra.mxu0 0
        %334 = vmatprep.subr.bf16.mxu0 0
        %335 = vmatpush2.bf16.msra.mxu0 0
        %336 = vmatprep.mubr.bf16.mxu0 0
        %337 = vmatmul.mubr.bf16.gmra.mxu0 %v295
        %v338 = vpop.f32.mrf.mxu0
        %v339 = vadd.f32 0.0, %v338
        %v340 = vpop.f32.mrf.mxu0
        %v341 = vadd.f32 0.0, %v340
        %v342 = vpop.f32.mrf.mxu0
        %v343 = vpop.f32.mrf.mxu0
        %344 = vdwg.mxu0
        %v346 = vsel %vm293, %v282, 0
        %v349 = vsel %vm297, %v286, 0
        %v352 = vsel %vm297, %v287, 0
        %354 = vmatprep.subr.bf16.mxu0 0
        %355 = vmatpush1.bf16.msra.mxu0 0
        %356 = vmatprep.subr.bf16.mxu0 0
        %357 = vmatpush1.bf16.msra.mxu0 0
        %358 = vmatprep.subr.bf16.mxu0 0
        %359 = vmatpush1.bf16.msra.mxu0 0
        %360 = vmatprep.subr.bf16.mxu0 0
        %361 = vmatpush1.bf16.msra.mxu0 0
        %362 = vmatprep.subr.bf16.mxu0 0
        %363 = vmatpush1.bf16.msra.mxu0 0
        %364 = vmatprep.subr.bf16.mxu0 0
        %365 = vmatpush1.bf16.msra.mxu0 0
        %366 = vmatprep.subr.bf16.mxu0 0
        %367 = vmatpush1.bf16.msra.mxu0 0
        %368 = vmatprep.subr.bf16.mxu0 %v352
        %369 = vmatpush1.bf16.msra.mxu0 %v349
        %370 = vmatprep.subr.bf16.mxu0 0
        %371 = vmatpush2.bf16.msra.mxu0 0
        %372 = vmatprep.subr.bf16.mxu0 0
        %373 = vmatpush2.bf16.msra.mxu0 0
        %374 = vmatprep.subr.bf16.mxu0 0
        %375 = vmatpush2.bf16.msra.mxu0 0
        %376 = vmatprep.subr.bf16.mxu0 0
        %377 = vmatpush2.bf16.msra.mxu0 0
        %378 = vmatprep.subr.bf16.mxu0 0
        %379 = vmatpush2.bf16.msra.mxu0 0
        %380 = vmatprep.subr.bf16.mxu0 0
        %381 = vmatpush2.bf16.msra.mxu0 0
        %382 = vmatprep.subr.bf16.mxu0 0
        %383 = vmatpush2.bf16.msra.mxu0 0
        %384 = vmatprep.subr.bf16.mxu0 0
        %385 = vmatpush2.bf16.msra.mxu0 0
        %386 = vmatprep.mubr.bf16.mxu0 0
        %387 = vmatmul.mubr.bf16.gmra.mxu0 %v346
        %v388 = vpop.f32.mrf.mxu0
        %v389 = vadd.f32 %v339, %v388
        %v390 = vpop.f32.mrf.mxu0
        %v391 = vadd.f32 %v341, %v390
        %v392 = vpop.f32.mrf.mxu0
        %v393 = vpop.f32.mrf.mxu0
        %394 = vdwg.mxu0
        %v395 = vsel %vm228, %v279, %v268
        %s396 = scalar_lea.vmem %s1, 4
        %v397 = vld [vmem:[%s396] sm:$0x3]
        %v399 = vcombine.high %v395, %v395
        %v401 = vpack.c.bf16 %v395, %v395
        %v402 = vpack.c.bf16 %v399, %v399
        %v404 = vsel %vm293, %v397, 0
        %v407 = vsel %vm297, %v401, 0
        %v410 = vsel %vm297, %v402, 0
        %412 = vmatprep.subr.bf16.mxu0 0
        %413 = vmatpush1.bf16.msra.mxu0 0
        %414 = vmatprep.subr.bf16.mxu0 0
        %415 = vmatpush1.bf16.msra.mxu0 0
        %416 = vmatprep.subr.bf16.mxu0 0
        %417 = vmatpush1.bf16.msra.mxu0 0
        %418 = vmatprep.subr.bf16.mxu0 0
        %419 = vmatpush1.bf16.msra.mxu0 0
        %420 = vmatprep.subr.bf16.mxu0 0
        %421 = vmatpush1.bf16.msra.mxu0 0
        %422 = vmatprep.subr.bf16.mxu0 0
        %423 = vmatpush1.bf16.msra.mxu0 0
        %424 = vmatprep.subr.bf16.mxu0 0
        %425 = vmatpush1.bf16.msra.mxu0 0
        %426 = vmatprep.subr.bf16.mxu0 %v410
        %427 = vmatpush1.bf16.msra.mxu0 %v407
        %428 = vmatprep.subr.bf16.mxu0 0
        %429 = vmatpush2.bf16.msra.mxu0 0
        %430 = vmatprep.subr.bf16.mxu0 0
        %431 = vmatpush2.bf16.msra.mxu0 0
        %432 = vmatprep.subr.bf16.mxu0 0
        %433 = vmatpush2.bf16.msra.mxu0 0
        %434 = vmatprep.subr.bf16.mxu0 0
        %435 = vmatpush2.bf16.msra.mxu0 0
        %436 = vmatprep.subr.bf16.mxu0 0
        %437 = vmatpush2.bf16.msra.mxu0 0
        %438 = vmatprep.subr.bf16.mxu0 0
        %439 = vmatpush2.bf16.msra.mxu0 0
        %440 = vmatprep.subr.bf16.mxu0 0
        %441 = vmatpush2.bf16.msra.mxu0 0
        %442 = vmatprep.subr.bf16.mxu0 0
        %443 = vmatpush2.bf16.msra.mxu0 0
        %444 = vmatprep.mubr.bf16.mxu0 0
        %445 = vmatmul.mubr.bf16.gmra.mxu0 %v404
        %v446 = vpop.f32.mrf.mxu0
        %v447 = vadd.f32 0.0, %v446
        %v448 = vpop.f32.mrf.mxu0
        %v449 = vadd.f32 0.0, %v448
        %v450 = vpop.f32.mrf.mxu0
        %v451 = vpop.f32.mrf.mxu0
        %452 = vdwg.mxu0
        %v453 = vadd.f32 %v389, %v447
        %v454 = vadd.f32 %v391, %v449
        %455 = vrot.lane.b32.xlu0 %v233, 127
        %v456 = vpop.permute.xlu0 %455
        %457 = vrot.lane.b32.xlu0 %v224, 127
        %v458 = vpop.permute.xlu0 %457
        %v459 = vrot.slane %v456, 4
        %v460 = vrot.slane %v458, 4
        %v461 = vsel %vm240, %v459, %v460
        %v462 = vsel %vm267, %v456, %v461
        %464 = vrot.lane.b32.xlu0 %v245, 1
        %v465 = vpop.permute.xlu0 %464
        %466 = vrot.lane.b32.xlu0 %v232, 1
        %v467 = vpop.permute.xlu0 %466
        %v468 = vrot.slane %v465, 4
        %v469 = vrot.slane %v467, 4
        %v470 = vsel %vm240, %v468, %v469
        %v471 = vsel %vm278, %v465, %v470
        %v473 = vsel %vm227, %v462, %v471
        %s474 = scalar_lea.vmem %s1, 6
        %v475 = vld [vmem:[%s474] sm:$0x3]
        %v477 = vcombine.high %v473, %v473
        %v479 = vpack.c.bf16 %v473, %v473
        %v480 = vpack.c.bf16 %v477, %v477
        %v482 = vsel %vm293, %v475, 0
        %v485 = vsel %vm297, %v479, 0
        %v488 = vsel %vm297, %v480, 0
        %490 = vmatprep.subr.bf16.mxu0 0
        %491 = vmatpush1.bf16.msra.mxu0 0
        %492 = vmatprep.subr.bf16.mxu0 0
        %493 = vmatpush1.bf16.msra.mxu0 0
        %494 = vmatprep.subr.bf16.mxu0 0
        %495 = vmatpush1.bf16.msra.mxu0 0
        %496 = vmatprep.subr.bf16.mxu0 0
        %497 = vmatpush1.bf16.msra.mxu0 0
        %498 = vmatprep.subr.bf16.mxu0 0
        %499 = vmatpush1.bf16.msra.mxu0 0
        %500 = vmatprep.subr.bf16.mxu0 0
        %501 = vmatpush1.bf16.msra.mxu0 0
        %502 = vmatprep.subr.bf16.mxu0 0
        %503 = vmatpush1.bf16.msra.mxu0 0
        %504 = vmatprep.subr.bf16.mxu0 %v488
        %505 = vmatpush1.bf16.msra.mxu0 %v485
        %506 = vmatprep.subr.bf16.mxu0 0
        %507 = vmatpush2.bf16.msra.mxu0 0
        %508 = vmatprep.subr.bf16.mxu0 0
        %509 = vmatpush2.bf16.msra.mxu0 0
        %510 = vmatprep.subr.bf16.mxu0 0
        %511 = vmatpush2.bf16.msra.mxu0 0
        %512 = vmatprep.subr.bf16.mxu0 0
        %513 = vmatpush2.bf16.msra.mxu0 0
        %514 = vmatprep.subr.bf16.mxu0 0
        %515 = vmatpush2.bf16.msra.mxu0 0
        %516 = vmatprep.subr.bf16.mxu0 0
        %517 = vmatpush2.bf16.msra.mxu0 0
        %518 = vmatprep.subr.bf16.mxu0 0
        %519 = vmatpush2.bf16.msra.mxu0 0
        %520 = vmatprep.subr.bf16.mxu0 0
        %521 = vmatpush2.bf16.msra.mxu0 0
        %522 = vmatprep.mubr.bf16.mxu0 0
        %523 = vmatmul.mubr.bf16.gmra.mxu0 %v482
        %v524 = vpop.f32.mrf.mxu0
        %v525 = vadd.f32 0.0, %v524
        %v526 = vpop.f32.mrf.mxu0
        %v527 = vadd.f32 0.0, %v526
        %v528 = vpop.f32.mrf.mxu0
        %v529 = vpop.f32.mrf.mxu0
        %530 = vdwg.mxu0
        %v531 = vadd.f32 %v453, %v525
        %v532 = vadd.f32 %v454, %v527
        %s533 = scalar_lea.vmem %s1, 8
        %v534 = vld [vmem:[%s533] sm:$0x3]
        %v536 = vpack.c.bf16 %v224, %v224
        %v537 = vpack.c.bf16 %v232, %v232
        %v539 = vsel %vm293, %v534, 0
        %v542 = vsel %vm297, %v536, 0
        %v545 = vsel %vm297, %v537, 0
        %547 = vmatprep.subr.bf16.mxu0 0
        %548 = vmatpush1.bf16.msra.mxu0 0
        %549 = vmatprep.subr.bf16.mxu0 0
        %550 = vmatpush1.bf16.msra.mxu0 0
        %551 = vmatprep.subr.bf16.mxu0 0
        %552 = vmatpush1.bf16.msra.mxu0 0
        %553 = vmatprep.subr.bf16.mxu0 0
        %554 = vmatpush1.bf16.msra.mxu0 0
        %555 = vmatprep.subr.bf16.mxu0 0
        %556 = vmatpush1.bf16.msra.mxu0 0
        %557 = vmatprep.subr.bf16.mxu0 0
        %558 = vmatpush1.bf16.msra.mxu0 0
        %559 = vmatprep.subr.bf16.mxu0 0
        %560 = vmatpush1.bf16.msra.mxu0 0
        %561 = vmatprep.subr.bf16.mxu0 %v545
        %562 = vmatpush1.bf16.msra.mxu0 %v542
        %563 = vmatprep.subr.bf16.mxu0 0
        %564 = vmatpush2.bf16.msra.mxu0 0
        %565 = vmatprep.subr.bf16.mxu0 0
        %566 = vmatpush2.bf16.msra.mxu0 0
        %567 = vmatprep.subr.bf16.mxu0 0
        %568 = vmatpush2.bf16.msra.mxu0 0
        %569 = vmatprep.subr.bf16.mxu0 0
        %570 = vmatpush2.bf16.msra.mxu0 0
        %571 = vmatprep.subr.bf16.mxu0 0
        %572 = vmatpush2.bf16.msra.mxu0 0
        %573 = vmatprep.subr.bf16.mxu0 0
        %574 = vmatpush2.bf16.msra.mxu0 0
        %575 = vmatprep.subr.bf16.mxu0 0
        %576 = vmatpush2.bf16.msra.mxu0 0
        %577 = vmatprep.subr.bf16.mxu0 0
        %578 = vmatpush2.bf16.msra.mxu0 0
        %579 = vmatprep.mubr.bf16.mxu0 0
        %580 = vmatmul.mubr.bf16.gmra.mxu0 %v539
        %v581 = vpop.f32.mrf.mxu0
        %v582 = vadd.f32 0.0, %v581
        %v583 = vpop.f32.mrf.mxu0
        %v584 = vadd.f32 0.0, %v583
        %v585 = vpop.f32.mrf.mxu0
        %v586 = vpop.f32.mrf.mxu0
        %587 = vdwg.mxu0
        %v588 = vadd.f32 %v531, %v582
        %v589 = vadd.f32 %v532, %v584
        %v590 = vsel %vm228, %v471, %v462
        %s591 = scalar_lea.vmem %s1, 10
        %v592 = vld [vmem:[%s591] sm:$0x3]
        %v594 = vcombine.high %v590, %v590
        %v596 = vpack.c.bf16 %v590, %v590
        %v597 = vpack.c.bf16 %v594, %v594
        %v599 = vsel %vm293, %v592, 0
        %v602 = vsel %vm297, %v596, 0
        %v605 = vsel %vm297, %v597, 0
        %607 = vmatprep.subr.bf16.mxu0 0
        %608 = vmatpush1.bf16.msra.mxu0 0
        %609 = vmatprep.subr.bf16.mxu0 0
        %610 = vmatpush1.bf16.msra.mxu0 0
        %611 = vmatprep.subr.bf16.mxu0 0
        %612 = vmatpush1.bf16.msra.mxu0 0
        %613 = vmatprep.subr.bf16.mxu0 0
        %614 = vmatpush1.bf16.msra.mxu0 0
        %615 = vmatprep.subr.bf16.mxu0 0
        %616 = vmatpush1.bf16.msra.mxu0 0
        %617 = vmatprep.subr.bf16.mxu0 0
        %618 = vmatpush1.bf16.msra.mxu0 0
        %619 = vmatprep.subr.bf16.mxu0 0
        %620 = vmatpush1.bf16.msra.mxu0 0
        %621 = vmatprep.subr.bf16.mxu0 %v605
        %622 = vmatpush1.bf16.msra.mxu0 %v602
        %623 = vmatprep.subr.bf16.mxu0 0
        %624 = vmatpush2.bf16.msra.mxu0 0
        %625 = vmatprep.subr.bf16.mxu0 0
        %626 = vmatpush2.bf16.msra.mxu0 0
        %627 = vmatprep.subr.bf16.mxu0 0
        %628 = vmatpush2.bf16.msra.mxu0 0
        %629 = vmatprep.subr.bf16.mxu0 0
        %630 = vmatpush2.bf16.msra.mxu0 0
        %631 = vmatprep.subr.bf16.mxu0 0
        %632 = vmatpush2.bf16.msra.mxu0 0
        %633 = vmatprep.subr.bf16.mxu0 0
        %634 = vmatpush2.bf16.msra.mxu0 0
        %635 = vmatprep.subr.bf16.mxu0 0
        %636 = vmatpush2.bf16.msra.mxu0 0
        %637 = vmatprep.subr.bf16.mxu0 0
        %638 = vmatpush2.bf16.msra.mxu0 0
        %639 = vmatprep.mubr.bf16.mxu0 0
        %640 = vmatmul.mubr.bf16.gmra.mxu0 %v599
        %v641 = vpop.f32.mrf.mxu0
        %v642 = vadd.f32 0.0, %v641
        %v643 = vpop.f32.mrf.mxu0
        %v644 = vadd.f32 0.0, %v643
        %v645 = vpop.f32.mrf.mxu0
        %v646 = vpop.f32.mrf.mxu0
        %647 = vdwg.mxu0
        %v648 = vadd.f32 %v588, %v642
        %v649 = vadd.f32 %v589, %v644
        %v650 = vsel %vm230, %v254, %v243
        %v652 = vcombine.high %v650, %v650
        %v653 = vcombine.low %v650, %v652
        %654 = vrot.lane.b32.xlu0 %v653, 127
        %v655 = vpop.permute.xlu0 %654
        %656 = vrot.lane.b32.xlu0 %v650, 127
        %v657 = vpop.permute.xlu0 %656
        %v658 = vrot.slane %v655, 4
        %v659 = vrot.slane %v657, 4
        %v660 = vsel %vm240, %v658, %v659
        %v661 = vsel %vm267, %v655, %v660
        %v663 = vcombine.low %v652, %v650
        %664 = vrot.lane.b32.xlu0 %v663, 1
        %v665 = vpop.permute.xlu0 %664
        %666 = vrot.lane.b32.xlu0 %v652, 1
        %v667 = vpop.permute.xlu0 %666
        %v668 = vrot.slane %v665, 4
        %v669 = vrot.slane %v667, 4
        %v670 = vsel %vm240, %v668, %v669
        %v671 = vsel %vm278, %v665, %v670
        %v673 = vsel %vm227, %v661, %v671
        %s674 = scalar_lea.vmem %s1, 12
        %v675 = vld [vmem:[%s674] sm:$0x3]
        %v677 = vcombine.high %v673, %v673
        %v679 = vpack.c.bf16 %v673, %v673
        %v680 = vpack.c.bf16 %v677, %v677
        %v682 = vsel %vm293, %v675, 0
        %v685 = vsel %vm297, %v679, 0
        %v688 = vsel %vm297, %v680, 0
        %690 = vmatprep.subr.bf16.mxu0 0
        %691 = vmatpush1.bf16.msra.mxu0 0
        %692 = vmatprep.subr.bf16.mxu0 0
        %693 = vmatpush1.bf16.msra.mxu0 0
        %694 = vmatprep.subr.bf16.mxu0 0
        %695 = vmatpush1.bf16.msra.mxu0 0
        %696 = vmatprep.subr.bf16.mxu0 0
        %697 = vmatpush1.bf16.msra.mxu0 0
        %698 = vmatprep.subr.bf16.mxu0 0
        %699 = vmatpush1.bf16.msra.mxu0 0
        %700 = vmatprep.subr.bf16.mxu0 0
        %701 = vmatpush1.bf16.msra.mxu0 0
        %702 = vmatprep.subr.bf16.mxu0 0
        %703 = vmatpush1.bf16.msra.mxu0 0
        %704 = vmatprep.subr.bf16.mxu0 %v688
        %705 = vmatpush1.bf16.msra.mxu0 %v685
        %706 = vmatprep.subr.bf16.mxu0 0
        %707 = vmatpush2.bf16.msra.mxu0 0
        %708 = vmatprep.subr.bf16.mxu0 0
        %709 = vmatpush2.bf16.msra.mxu0 0
        %710 = vmatprep.subr.bf16.mxu0 0
        %711 = vmatpush2.bf16.msra.mxu0 0
        %712 = vmatprep.subr.bf16.mxu0 0
        %713 = vmatpush2.bf16.msra.mxu0 0
        %714 = vmatprep.subr.bf16.mxu0 0
        %715 = vmatpush2.bf16.msra.mxu0 0
        %716 = vmatprep.subr.bf16.mxu0 0
        %717 = vmatpush2.bf16.msra.mxu0 0
        %718 = vmatprep.subr.bf16.mxu0 0
        %719 = vmatpush2.bf16.msra.mxu0 0
        %720 = vmatprep.subr.bf16.mxu0 0
        %721 = vmatpush2.bf16.msra.mxu0 0
        %722 = vmatprep.mubr.bf16.mxu0 0
        %723 = vmatmul.mubr.bf16.gmra.mxu0 %v682
        %v724 = vpop.f32.mrf.mxu0
        %v725 = vadd.f32 0.0, %v724
        %v726 = vpop.f32.mrf.mxu0
        %v727 = vadd.f32 0.0, %v726
        %v728 = vpop.f32.mrf.mxu0
        %v729 = vpop.f32.mrf.mxu0
        %730 = vdwg.mxu0
        %v731 = vadd.f32 %v648, %v725
        %v732 = vadd.f32 %v649, %v727
        %s733 = scalar_lea.vmem %s1, 14
        %v734 = vld [vmem:[%s733] sm:$0x3]
        %v736 = vpack.c.bf16 %v650, %v650
        %v737 = vpack.c.bf16 %v652, %v652
        %v739 = vsel %vm293, %v734, 0
        %v742 = vsel %vm297, %v736, 0
        %v745 = vsel %vm297, %v737, 0
        %747 = vmatprep.subr.bf16.mxu0 0
        %748 = vmatpush1.bf16.msra.mxu0 0
        %749 = vmatprep.subr.bf16.mxu0 0
        %750 = vmatpush1.bf16.msra.mxu0 0
        %751 = vmatprep.subr.bf16.mxu0 0
        %752 = vmatpush1.bf16.msra.mxu0 0
        %753 = vmatprep.subr.bf16.mxu0 0
        %754 = vmatpush1.bf16.msra.mxu0 0
        %755 = vmatprep.subr.bf16.mxu0 0
        %756 = vmatpush1.bf16.msra.mxu0 0
        %757 = vmatprep.subr.bf16.mxu0 0
        %758 = vmatpush1.bf16.msra.mxu0 0
        %759 = vmatprep.subr.bf16.mxu0 0
        %760 = vmatpush1.bf16.msra.mxu0 0
        %761 = vmatprep.subr.bf16.mxu0 %v745
        %762 = vmatpush1.bf16.msra.mxu0 %v742
        %763 = vmatprep.subr.bf16.mxu0 0
        %764 = vmatpush2.bf16.msra.mxu0 0
        %765 = vmatprep.subr.bf16.mxu0 0
        %766 = vmatpush2.bf16.msra.mxu0 0
        %767 = vmatprep.subr.bf16.mxu0 0
        %768 = vmatpush2.bf16.msra.mxu0 0
        %769 = vmatprep.subr.bf16.mxu0 0
        %770 = vmatpush2.bf16.msra.mxu0 0
        %771 = vmatprep.subr.bf16.mxu0 0
        %772 = vmatpush2.bf16.msra.mxu0 0
        %773 = vmatprep.subr.bf16.mxu0 0
        %774 = vmatpush2.bf16.msra.mxu0 0
        %775 = vmatprep.subr.bf16.mxu0 0
        %776 = vmatpush2.bf16.msra.mxu0 0
        %777 = vmatprep.subr.bf16.mxu0 0
        %778 = vmatpush2.bf16.msra.mxu0 0
        %779 = vmatprep.mubr.bf16.mxu0 0
        %780 = vmatmul.mubr.bf16.gmra.mxu0 %v739
        %v781 = vpop.f32.mrf.mxu0
        %v782 = vadd.f32 0.0, %v781
        %v783 = vpop.f32.mrf.mxu0
        %v784 = vadd.f32 0.0, %v783
        %v785 = vpop.f32.mrf.mxu0
        %v786 = vpop.f32.mrf.mxu0
        %787 = vdwg.mxu0
        %v788 = vadd.f32 %v731, %v782
        %v789 = vadd.f32 %v732, %v784
        %v790 = vsel %vm228, %v671, %v661
        %s791 = scalar_lea.vmem %s1, 16
        %v792 = vld [vmem:[%s791] sm:$0x3]
        %v794 = vcombine.high %v790, %v790
        %v796 = vpack.c.bf16 %v790, %v790
        %v797 = vpack.c.bf16 %v794, %v794
        %v799 = vsel %vm293, %v792, 0
        %v802 = vsel %vm297, %v796, 0
        %v805 = vsel %vm297, %v797, 0
        %807 = vmatprep.subr.bf16.mxu0 0
        %808 = vmatpush1.bf16.msra.mxu0 0
        %809 = vmatprep.subr.bf16.mxu0 0
        %810 = vmatpush1.bf16.msra.mxu0 0
        %811 = vmatprep.subr.bf16.mxu0 0
        %812 = vmatpush1.bf16.msra.mxu0 0
        %813 = vmatprep.subr.bf16.mxu0 0
        %814 = vmatpush1.bf16.msra.mxu0 0
        %815 = vmatprep.subr.bf16.mxu0 0
        %816 = vmatpush1.bf16.msra.mxu0 0
        %817 = vmatprep.subr.bf16.mxu0 0
        %818 = vmatpush1.bf16.msra.mxu0 0
        %819 = vmatprep.subr.bf16.mxu0 0
        %820 = vmatpush1.bf16.msra.mxu0 0
        %821 = vmatprep.subr.bf16.mxu0 %v805
        %822 = vmatpush1.bf16.msra.mxu0 %v802
        %823 = vmatprep.subr.bf16.mxu0 0
        %824 = vmatpush2.bf16.msra.mxu0 0
        %825 = vmatprep.subr.bf16.mxu0 0
        %826 = vmatpush2.bf16.msra.mxu0 0
        %827 = vmatprep.subr.bf16.mxu0 0
        %828 = vmatpush2.bf16.msra.mxu0 0
        %829 = vmatprep.subr.bf16.mxu0 0
        %830 = vmatpush2.bf16.msra.mxu0 0
        %831 = vmatprep.subr.bf16.mxu0 0
        %832 = vmatpush2.bf16.msra.mxu0 0
        %833 = vmatprep.subr.bf16.mxu0 0
        %834 = vmatpush2.bf16.msra.mxu0 0
        %835 = vmatprep.subr.bf16.mxu0 0
        %836 = vmatpush2.bf16.msra.mxu0 0
        %837 = vmatprep.subr.bf16.mxu0 0
        %838 = vmatpush2.bf16.msra.mxu0 0
        %839 = vmatprep.mubr.bf16.mxu0 0
        %840 = vmatmul.mubr.bf16.gmra.mxu0 %v799
        %v841 = vpop.f32.mrf.mxu0
        %v842 = vadd.f32 0.0, %v841
        %v843 = vpop.f32.mrf.mxu0
        %v844 = vadd.f32 0.0, %v843
        %v845 = vpop.f32.mrf.mxu0
        %v846 = vpop.f32.mrf.mxu0
        %847 = vdwg.mxu0
        %v848 = vadd.f32 %v788, %v842
        %v849 = vadd.f32 %v789, %v844
        %v850 = vsel %vm240, %v848, 0.0
        %v851 = vsel %vm240, %v849, 0.0
        %v852 = vadd.f32 %v850, %v851
        %853 = vadd.xlane.f32.xlu0 %v852
        %v854 = vpop.xlane.xlu0 %853
        %v855 = vmul.f32 %v854, 0.00390625
        %v856 = vmul.f32 %v848, %v848
        %v857 = vmul.f32 %v849, %v849
        %v858 = vsel %vm240, %v856, 0.0
        %v859 = vsel %vm240, %v857, 0.0
        %v860 = vadd.f32 %v858, %v859
        %861 = vadd.xlane.f32.xlu0 %v860
        %v862 = vpop.xlane.xlu0 %861
        %v863 = vmul.f32 %v862, 0.00390625
        %v864 = vmul.f32 %v855, %v855
        %v865 = vsub.f32 %v863, %v864
        %v866 = vsub.f32 %v848, %v855
        %v867 = vsub.f32 %v849, %v855
        %v868 = vadd.f32 %v865, 1e-05
        %v869 = vrsqrt.pop %v868
        %v870 = vmul.f32 %v866, %v869
        %v871 = vmul.f32 %v867, %v869
        %v872 = vmax.f32 %v870, 0.0
        %v873 = vmax.f32 %v871, 0.0
        %v876 = vcombine.low %v872, %v873
        %877 = vrot.lane.b32.xlu0 %v876, 112
        %v878 = vpop.permute.xlu0 %877
        %879 = vrot.lane.b32.xlu0 %v872, 112
        %v880 = vpop.permute.xlu0 %879
        %v881 = vrot.slane %v878, 4
        %v882 = vrot.slane %v880, 4
        %v883 = vsel %vm240, %v881, %v882
        %v884 = vsel %vm242, %v878, %v883
        %v886 = vcombine.low %v873, %v872
        %887 = vrot.lane.b32.xlu0 %v886, 16
        %v888 = vpop.permute.xlu0 %887
        %889 = vrot.lane.b32.xlu0 %v873, 16
        %v890 = vpop.permute.xlu0 %889
        %v891 = vrot.slane %v888, 4
        %v892 = vrot.slane %v890, 4
        %v893 = vsel %vm240, %v891, %v892
        %v894 = vsel %vm253, %v888, %v893
        %v896 = vsel %vm229, %v884, %v894
        %v898 = vcombine.high %v896, %v896
        %v899 = vcombine.low %v896, %v898
        %900 = vrot.lane.b32.xlu0 %v899, 127
        %v901 = vpop.permute.xlu0 %900
        %902 = vrot.lane.b32.xlu0 %v896, 127
        %v903 = vpop.permute.xlu0 %902
        %v904 = vrot.slane %v901, 4
        %v905 = vrot.slane %v903, 4
        %v906 = vsel %vm240, %v904, %v905
        %v907 = vsel %vm267, %v901, %v906
        %v909 = vcombine.low %v898, %v896
        %910 = vrot.lane.b32.xlu0 %v909, 1
        %v911 = vpop.permute.xlu0 %910
        %912 = vrot.lane.b32.xlu0 %v898, 1
        %v913 = vpop.permute.xlu0 %912
        %v914 = vrot.slane %v911, 4
        %v915 = vrot.slane %v913, 4
        %v916 = vsel %vm240, %v914, %v915
        %v917 = vsel %vm278, %v911, %v916
        %v919 = vsel %vm227, %v907, %v917
        %v920 = vld [vmem:[%s2] sm:$0x3]
        %v922 = vcombine.high %v919, %v919
        %v924 = vpack.c.bf16 %v919, %v919
        %v925 = vpack.c.bf16 %v922, %v922
        %s926 = scalar_lea.vmem %s2, 2
        %v927 = vld [vmem:[%s926] sm:$0x3]
        %v929 = vpack.c.bf16 %v896, %v896
        %v930 = vpack.c.bf16 %v898, %v898
        %v932 = vsel %vm293, %v927, 0
        %v935 = vsel %vm297, %v929, 0
        %v938 = vsel %vm297, %v930, 0
        %940 = vmatprep.subr.bf16.mxu0 0
        %941 = vmatpush1.bf16.msra.mxu0 0
        %942 = vmatprep.subr.bf16.mxu0 0
        %943 = vmatpush1.bf16.msra.mxu0 0
        %944 = vmatprep.subr.bf16.mxu0 0
        %945 = vmatpush1.bf16.msra.mxu0 0
        %946 = vmatprep.subr.bf16.mxu0 0
        %947 = vmatpush1.bf16.msra.mxu0 0
        %948 = vmatprep.subr.bf16.mxu0 0
        %949 = vmatpush1.bf16.msra.mxu0 0
        %950 = vmatprep.subr.bf16.mxu0 0
        %951 = vmatpush1.bf16.msra.mxu0 0
        %952 = vmatprep.subr.bf16.mxu0 0
        %953 = vmatpush1.bf16.msra.mxu0 0
        %954 = vmatprep.subr.bf16.mxu0 %v938
        %955 = vmatpush1.bf16.msra.mxu0 %v935
        %956 = vmatprep.subr.bf16.mxu0 0
        %957 = vmatpush2.bf16.msra.mxu0 0
        %958 = vmatprep.subr.bf16.mxu0 0
        %959 = vmatpush2.bf16.msra.mxu0 0
        %960 = vmatprep.subr.bf16.mxu0 0
        %961 = vmatpush2.bf16.msra.mxu0 0
        %962 = vmatprep.subr.bf16.mxu0 0
        %963 = vmatpush2.bf16.msra.mxu0 0
        %964 = vmatprep.subr.bf16.mxu0 0
        %965 = vmatpush2.bf16.msra.mxu0 0
        %966 = vmatprep.subr.bf16.mxu0 0
        %967 = vmatpush2.bf16.msra.mxu0 0
        %968 = vmatprep.subr.bf16.mxu0 0
        %969 = vmatpush2.bf16.msra.mxu0 0
        %970 = vmatprep.subr.bf16.mxu0 0
        %971 = vmatpush2.bf16.msra.mxu0 0
        %972 = vmatprep.mubr.bf16.mxu0 0
        %973 = vmatmul.mubr.bf16.gmra.mxu0 %v932
        %v974 = vpop.f32.mrf.mxu0
        %v975 = vadd.f32 0.0, %v974
        %v976 = vpop.f32.mrf.mxu0
        %v977 = vadd.f32 0.0, %v976
        %v978 = vpop.f32.mrf.mxu0
        %v979 = vpop.f32.mrf.mxu0
        %980 = vdwg.mxu0
        %v982 = vsel %vm293, %v920, 0
        %v985 = vsel %vm297, %v924, 0
        %v988 = vsel %vm297, %v925, 0
        %990 = vmatprep.subr.bf16.mxu0 0
        %991 = vmatpush1.bf16.msra.mxu0 0
        %992 = vmatprep.subr.bf16.mxu0 0
        %993 = vmatpush1.bf16.msra.mxu0 0
        %994 = vmatprep.subr.bf16.mxu0 0
        %995 = vmatpush1.bf16.msra.mxu0 0
        %996 = vmatprep.subr.bf16.mxu0 0
        %997 = vmatpush1.bf16.msra.mxu0 0
        %998 = vmatprep.subr.bf16.mxu0 0
        %999 = vmatpush1.bf16.msra.mxu0 0
        %1000 = vmatprep.subr.bf16.mxu0 0
        %1001 = vmatpush1.bf16.msra.mxu0 0
        %1002 = vmatprep.subr.bf16.mxu0 0
        %1003 = vmatpush1.bf16.msra.mxu0 0
        %1004 = vmatprep.subr.bf16.mxu0 %v988
        %1005 = vmatpush1.bf16.msra.mxu0 %v985
        %1006 = vmatprep.subr.bf16.mxu0 0
        %1007 = vmatpush2.bf16.msra.mxu0 0
        %1008 = vmatprep.subr.bf16.mxu0 0
        %1009 = vmatpush2.bf16.msra.mxu0 0
        %1010 = vmatprep.subr.bf16.mxu0 0
        %1011 = vmatpush2.bf16.msra.mxu0 0
        %1012 = vmatprep.subr.bf16.mxu0 0
        %1013 = vmatpush2.bf16.msra.mxu0 0
        %1014 = vmatprep.subr.bf16.mxu0 0
        %1015 = vmatpush2.bf16.msra.mxu0 0
        %1016 = vmatprep.subr.bf16.mxu0 0
        %1017 = vmatpush2.bf16.msra.mxu0 0
        %1018 = vmatprep.subr.bf16.mxu0 0
        %1019 = vmatpush2.bf16.msra.mxu0 0
        %1020 = vmatprep.subr.bf16.mxu0 0
        %1021 = vmatpush2.bf16.msra.mxu0 0
        %1022 = vmatprep.mubr.bf16.mxu0 0
        %1023 = vmatmul.mubr.bf16.gmra.mxu0 %v982
        %v1024 = vpop.f32.mrf.mxu0
        %v1025 = vadd.f32 %v975, %v1024
        %v1026 = vpop.f32.mrf.mxu0
        %v1027 = vadd.f32 %v977, %v1026
        %v1028 = vpop.f32.mrf.mxu0
        %v1029 = vpop.f32.mrf.mxu0
        %1030 = vdwg.mxu0
        %v1031 = vsel %vm228, %v917, %v907
        %s1032 = scalar_lea.vmem %s2, 4
        %v1033 = vld [vmem:[%s1032] sm:$0x3]
        %v1035 = vcombine.high %v1031, %v1031
        %v1037 = vpack.c.bf16 %v1031, %v1031
        %v1038 = vpack.c.bf16 %v1035, %v1035
        %v1040 = vsel %vm293, %v1033, 0
        %v1043 = vsel %vm297, %v1037, 0
        %v1046 = vsel %vm297, %v1038, 0
        %1048 = vmatprep.subr.bf16.mxu0 0
        %1049 = vmatpush1.bf16.msra.mxu0 0
        %1050 = vmatprep.subr.bf16.mxu0 0
        %1051 = vmatpush1.bf16.msra.mxu0 0
        %1052 = vmatprep.subr.bf16.mxu0 0
        %1053 = vmatpush1.bf16.msra.mxu0 0
        %1054 = vmatprep.subr.bf16.mxu0 0
        %1055 = vmatpush1.bf16.msra.mxu0 0
        %1056 = vmatprep.subr.bf16.mxu0 0
        %1057 = vmatpush1.bf16.msra.mxu0 0
        %1058 = vmatprep.subr.bf16.mxu0 0
        %1059 = vmatpush1.bf16.msra.mxu0 0
        %1060 = vmatprep.subr.bf16.mxu0 0
        %1061 = vmatpush1.bf16.msra.mxu0 0
        %1062 = vmatprep.subr.bf16.mxu0 %v1046
        %1063 = vmatpush1.bf16.msra.mxu0 %v1043
        %1064 = vmatprep.subr.bf16.mxu0 0
        %1065 = vmatpush2.bf16.msra.mxu0 0
        %1066 = vmatprep.subr.bf16.mxu0 0
        %1067 = vmatpush2.bf16.msra.mxu0 0
        %1068 = vmatprep.subr.bf16.mxu0 0
        %1069 = vmatpush2.bf16.msra.mxu0 0
        %1070 = vmatprep.subr.bf16.mxu0 0
        %1071 = vmatpush2.bf16.msra.mxu0 0
        %1072 = vmatprep.subr.bf16.mxu0 0
        %1073 = vmatpush2.bf16.msra.mxu0 0
        %1074 = vmatprep.subr.bf16.mxu0 0
        %1075 = vmatpush2.bf16.msra.mxu0 0
        %1076 = vmatprep.subr.bf16.mxu0 0
        %1077 = vmatpush2.bf16.msra.mxu0 0
        %1078 = vmatprep.subr.bf16.mxu0 0
        %1079 = vmatpush2.bf16.msra.mxu0 0
        %1080 = vmatprep.mubr.bf16.mxu0 0
        %1081 = vmatmul.mubr.bf16.gmra.mxu0 %v1040
        %v1082 = vpop.f32.mrf.mxu0
        %v1083 = vadd.f32 0.0, %v1082
        %v1084 = vpop.f32.mrf.mxu0
        %v1085 = vadd.f32 0.0, %v1084
        %v1086 = vpop.f32.mrf.mxu0
        %v1087 = vpop.f32.mrf.mxu0
        %1088 = vdwg.mxu0
        %v1089 = vadd.f32 %v1025, %v1083
        %v1090 = vadd.f32 %v1027, %v1085
        %1091 = vrot.lane.b32.xlu0 %v876, 127
        %v1092 = vpop.permute.xlu0 %1091
        %1093 = vrot.lane.b32.xlu0 %v872, 127
        %v1094 = vpop.permute.xlu0 %1093
        %v1095 = vrot.slane %v1092, 4
        %v1096 = vrot.slane %v1094, 4
        %v1097 = vsel %vm240, %v1095, %v1096
        %v1098 = vsel %vm267, %v1092, %v1097
        %1100 = vrot.lane.b32.xlu0 %v886, 1
        %v1101 = vpop.permute.xlu0 %1100
        %1102 = vrot.lane.b32.xlu0 %v873, 1
        %v1103 = vpop.permute.xlu0 %1102
        %v1104 = vrot.slane %v1101, 4
        %v1105 = vrot.slane %v1103, 4
        %v1106 = vsel %vm240, %v1104, %v1105
        %v1107 = vsel %vm278, %v1101, %v1106
        %v1109 = vsel %vm227, %v1098, %v1107
        %s1110 = scalar_lea.vmem %s2, 6
        %v1111 = vld [vmem:[%s1110] sm:$0x3]
        %v1113 = vcombine.high %v1109, %v1109
        %v1115 = vpack.c.bf16 %v1109, %v1109
        %v1116 = vpack.c.bf16 %v1113, %v1113
        %v1118 = vsel %vm293, %v1111, 0
        %v1121 = vsel %vm297, %v1115, 0
        %v1124 = vsel %vm297, %v1116, 0
        %1126 = vmatprep.subr.bf16.mxu0 0
        %1127 = vmatpush1.bf16.msra.mxu0 0
        %1128 = vmatprep.subr.bf16.mxu0 0
        %1129 = vmatpush1.bf16.msra.mxu0 0
        %1130 = vmatprep.subr.bf16.mxu0 0
        %1131 = vmatpush1.bf16.msra.mxu0 0
        %1132 = vmatprep.subr.bf16.mxu0 0
        %1133 = vmatpush1.bf16.msra.mxu0 0
        %1134 = vmatprep.subr.bf16.mxu0 0
        %1135 = vmatpush1.bf16.msra.mxu0 0
        %1136 = vmatprep.subr.bf16.mxu0 0
        %1137 = vmatpush1.bf16.msra.mxu0 0
        %1138 = vmatprep.subr.bf16.mxu0 0
        %1139 = vmatpush1.bf16.msra.mxu0 0
        %1140 = vmatprep.subr.bf16.mxu0 %v1124
        %1141 = vmatpush1.bf16.msra.mxu0 %v1121
        %1142 = vmatprep.subr.bf16.mxu0 0
        %1143 = vmatpush2.bf16.msra.mxu0 0
        %1144 = vmatprep.subr.bf16.mxu0 0
        %1145 = vmatpush2.bf16.msra.mxu0 0
        %1146 = vmatprep.subr.bf16.mxu0 0
        %1147 = vmatpush2.bf16.msra.mxu0 0
        %1148 = vmatprep.subr.bf16.mxu0 0
        %1149 = vmatpush2.bf16.msra.mxu0 0
        %1150 = vmatprep.subr.bf16.mxu0 0
        %1151 = vmatpush2.bf16.msra.mxu0 0
        %1152 = vmatprep.subr.bf16.mxu0 0
        %1153 = vmatpush2.bf16.msra.mxu0 0
        %1154 = vmatprep.subr.bf16.mxu0 0
        %1155 = vmatpush2.bf16.msra.mxu0 0
        %1156 = vmatprep.subr.bf16.mxu0 0
        %1157 = vmatpush2.bf16.msra.mxu0 0
        %1158 = vmatprep.mubr.bf16.mxu0 0
        %1159 = vmatmul.mubr.bf16.gmra.mxu0 %v1118
        %v1160 = vpop.f32.mrf.mxu0
        %v1161 = vadd.f32 0.0, %v1160
        %v1162 = vpop.f32.mrf.mxu0
        %v1163 = vadd.f32 0.0, %v1162
        %v1164 = vpop.f32.mrf.mxu0
        %v1165 = vpop.f32.mrf.mxu0
        %1166 = vdwg.mxu0
        %v1167 = vadd.f32 %v1089, %v1161
        %v1168 = vadd.f32 %v1090, %v1163
        %s1169 = scalar_lea.vmem %s2, 8
        %v1170 = vld [vmem:[%s1169] sm:$0x3]
        %v1171 = vpack.c.bf16 %v872, %v872
        %v1172 = vpack.c.bf16 %v873, %v873
        %v1174 = vsel %vm293, %v1170, 0
        %v1177 = vsel %vm297, %v1171, 0
        %v1180 = vsel %vm297, %v1172, 0
        %1182 = vmatprep.subr.bf16.mxu0 0
        %1183 = vmatpush1.bf16.msra.mxu0 0
        %1184 = vmatprep.subr.bf16.mxu0 0
        %1185 = vmatpush1.bf16.msra.mxu0 0
        %1186 = vmatprep.subr.bf16.mxu0 0
        %1187 = vmatpush1.bf16.msra.mxu0 0
        %1188 = vmatprep.subr.bf16.mxu0 0
        %1189 = vmatpush1.bf16.msra.mxu0 0
        %1190 = vmatprep.subr.bf16.mxu0 0
        %1191 = vmatpush1.bf16.msra.mxu0 0
        %1192 = vmatprep.subr.bf16.mxu0 0
        %1193 = vmatpush1.bf16.msra.mxu0 0
        %1194 = vmatprep.subr.bf16.mxu0 0
        %1195 = vmatpush1.bf16.msra.mxu0 0
        %1196 = vmatprep.subr.bf16.mxu0 %v1180
        %1197 = vmatpush1.bf16.msra.mxu0 %v1177
        %1198 = vmatprep.subr.bf16.mxu0 0
        %1199 = vmatpush2.bf16.msra.mxu0 0
        %1200 = vmatprep.subr.bf16.mxu0 0
        %1201 = vmatpush2.bf16.msra.mxu0 0
        %1202 = vmatprep.subr.bf16.mxu0 0
        %1203 = vmatpush2.bf16.msra.mxu0 0
        %1204 = vmatprep.subr.bf16.mxu0 0
        %1205 = vmatpush2.bf16.msra.mxu0 0
        %1206 = vmatprep.subr.bf16.mxu0 0
        %1207 = vmatpush2.bf16.msra.mxu0 0
        %1208 = vmatprep.subr.bf16.mxu0 0
        %1209 = vmatpush2.bf16.msra.mxu0 0
        %1210 = vmatprep.subr.bf16.mxu0 0
        %1211 = vmatpush2.bf16.msra.mxu0 0
        %1212 = vmatprep.subr.bf16.mxu0 0
        %1213 = vmatpush2.bf16.msra.mxu0 0
        %1214 = vmatprep.mubr.bf16.mxu0 0
        %1215 = vmatmul.mubr.bf16.gmra.mxu0 %v1174
        %v1216 = vpop.f32.mrf.mxu0
        %v1217 = vadd.f32 0.0, %v1216
        %v1218 = vpop.f32.mrf.mxu0
        %v1219 = vadd.f32 0.0, %v1218
        %v1220 = vpop.f32.mrf.mxu0
        %v1221 = vpop.f32.mrf.mxu0
        %1222 = vdwg.mxu0
        %v1223 = vadd.f32 %v1167, %v1217
        %v1224 = vadd.f32 %v1168, %v1219
        %v1225 = vsel %vm228, %v1107, %v1098
        %s1226 = scalar_lea.vmem %s2, 10
        %v1227 = vld [vmem:[%s1226] sm:$0x3]
        %v1229 = vcombine.high %v1225, %v1225
        %v1231 = vpack.c.bf16 %v1225, %v1225
        %v1232 = vpack.c.bf16 %v1229, %v1229
        %v1234 = vsel %vm293, %v1227, 0
        %v1237 = vsel %vm297, %v1231, 0
        %v1240 = vsel %vm297, %v1232, 0
        %1242 = vmatprep.subr.bf16.mxu0 0
        %1243 = vmatpush1.bf16.msra.mxu0 0
        %1244 = vmatprep.subr.bf16.mxu0 0
        %1245 = vmatpush1.bf16.msra.mxu0 0
        %1246 = vmatprep.subr.bf16.mxu0 0
        %1247 = vmatpush1.bf16.msra.mxu0 0
        %1248 = vmatprep.subr.bf16.mxu0 0
        %1249 = vmatpush1.bf16.msra.mxu0 0
        %1250 = vmatprep.subr.bf16.mxu0 0
        %1251 = vmatpush1.bf16.msra.mxu0 0
        %1252 = vmatprep.subr.bf16.mxu0 0
        %1253 = vmatpush1.bf16.msra.mxu0 0
        %1254 = vmatprep.subr.bf16.mxu0 0
        %1255 = vmatpush1.bf16.msra.mxu0 0
        %1256 = vmatprep.subr.bf16.mxu0 %v1240
        %1257 = vmatpush1.bf16.msra.mxu0 %v1237
        %1258 = vmatprep.subr.bf16.mxu0 0
        %1259 = vmatpush2.bf16.msra.mxu0 0
        %1260 = vmatprep.subr.bf16.mxu0 0
        %1261 = vmatpush2.bf16.msra.mxu0 0
        %1262 = vmatprep.subr.bf16.mxu0 0
        %1263 = vmatpush2.bf16.msra.mxu0 0
        %1264 = vmatprep.subr.bf16.mxu0 0
        %1265 = vmatpush2.bf16.msra.mxu0 0
        %1266 = vmatprep.subr.bf16.mxu0 0
        %1267 = vmatpush2.bf16.msra.mxu0 0
        %1268 = vmatprep.subr.bf16.mxu0 0
        %1269 = vmatpush2.bf16.msra.mxu0 0
        %1270 = vmatprep.subr.bf16.mxu0 0
        %1271 = vmatpush2.bf16.msra.mxu0 0
        %1272 = vmatprep.subr.bf16.mxu0 0
        %1273 = vmatpush2.bf16.msra.mxu0 0
        %1274 = vmatprep.mubr.bf16.mxu0 0
        %1275 = vmatmul.mubr.bf16.gmra.mxu0 %v1234
        %v1276 = vpop.f32.mrf.mxu0
        %v1277 = vadd.f32 0.0, %v1276
        %v1278 = vpop.f32.mrf.mxu0
        %v1279 = vadd.f32 0.0, %v1278
        %v1280 = vpop.f32.mrf.mxu0
        %v1281 = vpop.f32.mrf.mxu0
        %1282 = vdwg.mxu0
        %v1283 = vadd.f32 %v1223, %v1277
        %v1284 = vadd.f32 %v1224, %v1279
        %v1285 = vsel %vm230, %v894, %v884
        %v1287 = vcombine.high %v1285, %v1285
        %v1288 = vcombine.low %v1285, %v1287
        %1289 = vrot.lane.b32.xlu0 %v1288, 127
        %v1290 = vpop.permute.xlu0 %1289
        %1291 = vrot.lane.b32.xlu0 %v1285, 127
        %v1292 = vpop.permute.xlu0 %1291
        %v1293 = vrot.slane %v1290, 4
        %v1294 = vrot.slane %v1292, 4
        %v1295 = vsel %vm240, %v1293, %v1294
        %v1296 = vsel %vm267, %v1290, %v1295
        %v1298 = vcombine.low %v1287, %v1285
        %1299 = vrot.lane.b32.xlu0 %v1298, 1
        %v1300 = vpop.permute.xlu0 %1299
        %1301 = vrot.lane.b32.xlu0 %v1287, 1
        %v1302 = vpop.permute.xlu0 %1301
        %v1303 = vrot.slane %v1300, 4
        %v1304 = vrot.slane %v1302, 4
        %v1305 = vsel %vm240, %v1303, %v1304
        %v1306 = vsel %vm278, %v1300, %v1305
        %v1308 = vsel %vm227, %v1296, %v1306
        %s1309 = scalar_lea.vmem %s2, 12
        %v1310 = vld [vmem:[%s1309] sm:$0x3]
        %v1312 = vcombine.high %v1308, %v1308
        %v1314 = vpack.c.bf16 %v1308, %v1308
        %v1315 = vpack.c.bf16 %v1312, %v1312
        %v1317 = vsel %vm293, %v1310, 0
        %v1320 = vsel %vm297, %v1314, 0
        %v1323 = vsel %vm297, %v1315, 0
        %1325 = vmatprep.subr.bf16.mxu0 0
        %1326 = vmatpush1.bf16.msra.mxu0 0
        %1327 = vmatprep.subr.bf16.mxu0 0
        %1328 = vmatpush1.bf16.msra.mxu0 0
        %1329 = vmatprep.subr.bf16.mxu0 0
        %1330 = vmatpush1.bf16.msra.mxu0 0
        %1331 = vmatprep.subr.bf16.mxu0 0
        %1332 = vmatpush1.bf16.msra.mxu0 0
        %1333 = vmatprep.subr.bf16.mxu0 0
        %1334 = vmatpush1.bf16.msra.mxu0 0
        %1335 = vmatprep.subr.bf16.mxu0 0
        %1336 = vmatpush1.bf16.msra.mxu0 0
        %1337 = vmatprep.subr.bf16.mxu0 0
        %1338 = vmatpush1.bf16.msra.mxu0 0
        %1339 = vmatprep.subr.bf16.mxu0 %v1323
        %1340 = vmatpush1.bf16.msra.mxu0 %v1320
        %1341 = vmatprep.subr.bf16.mxu0 0
        %1342 = vmatpush2.bf16.msra.mxu0 0
        %1343 = vmatprep.subr.bf16.mxu0 0
        %1344 = vmatpush2.bf16.msra.mxu0 0
        %1345 = vmatprep.subr.bf16.mxu0 0
        %1346 = vmatpush2.bf16.msra.mxu0 0
        %1347 = vmatprep.subr.bf16.mxu0 0
        %1348 = vmatpush2.bf16.msra.mxu0 0
        %1349 = vmatprep.subr.bf16.mxu0 0
        %1350 = vmatpush2.bf16.msra.mxu0 0
        %1351 = vmatprep.subr.bf16.mxu0 0
        %1352 = vmatpush2.bf16.msra.mxu0 0
        %1353 = vmatprep.subr.bf16.mxu0 0
        %1354 = vmatpush2.bf16.msra.mxu0 0
        %1355 = vmatprep.subr.bf16.mxu0 0
        %1356 = vmatpush2.bf16.msra.mxu0 0
        %1357 = vmatprep.mubr.bf16.mxu0 0
        %1358 = vmatmul.mubr.bf16.gmra.mxu0 %v1317
        %v1359 = vpop.f32.mrf.mxu0
        %v1360 = vadd.f32 0.0, %v1359
        %v1361 = vpop.f32.mrf.mxu0
        %v1362 = vadd.f32 0.0, %v1361
        %v1363 = vpop.f32.mrf.mxu0
        %v1364 = vpop.f32.mrf.mxu0
        %1365 = vdwg.mxu0
        %v1366 = vadd.f32 %v1283, %v1360
        %v1367 = vadd.f32 %v1284, %v1362
        %s1368 = scalar_lea.vmem %s2, 14
        %v1369 = vld [vmem:[%s1368] sm:$0x3]
        %v1371 = vpack.c.bf16 %v1285, %v1285
        %v1372 = vpack.c.bf16 %v1287, %v1287
        %v1374 = vsel %vm293, %v1369, 0
        %v1377 = vsel %vm297, %v1371, 0
        %v1380 = vsel %vm297, %v1372, 0
        %1382 = vmatprep.subr.bf16.mxu0 0
        %1383 = vmatpush1.bf16.msra.mxu0 0
        %1384 = vmatprep.subr.bf16.mxu0 0
        %1385 = vmatpush1.bf16.msra.mxu0 0
        %1386 = vmatprep.subr.bf16.mxu0 0
        %1387 = vmatpush1.bf16.msra.mxu0 0
        %1388 = vmatprep.subr.bf16.mxu0 0
        %1389 = vmatpush1.bf16.msra.mxu0 0
        %1390 = vmatprep.subr.bf16.mxu0 0
        %1391 = vmatpush1.bf16.msra.mxu0 0
        %1392 = vmatprep.subr.bf16.mxu0 0
        %1393 = vmatpush1.bf16.msra.mxu0 0
        %1394 = vmatprep.subr.bf16.mxu0 0
        %1395 = vmatpush1.bf16.msra.mxu0 0
        %1396 = vmatprep.subr.bf16.mxu0 %v1380
        %1397 = vmatpush1.bf16.msra.mxu0 %v1377
        %1398 = vmatprep.subr.bf16.mxu0 0
        %1399 = vmatpush2.bf16.msra.mxu0 0
        %1400 = vmatprep.subr.bf16.mxu0 0
        %1401 = vmatpush2.bf16.msra.mxu0 0
        %1402 = vmatprep.subr.bf16.mxu0 0
        %1403 = vmatpush2.bf16.msra.mxu0 0
        %1404 = vmatprep.subr.bf16.mxu0 0
        %1405 = vmatpush2.bf16.msra.mxu0 0
        %1406 = vmatprep.subr.bf16.mxu0 0
        %1407 = vmatpush2.bf16.msra.mxu0 0
        %1408 = vmatprep.subr.bf16.mxu0 0
        %1409 = vmatpush2.bf16.msra.mxu0 0
        %1410 = vmatprep.subr.bf16.mxu0 0
        %1411 = vmatpush2.bf16.msra.mxu0 0
        %1412 = vmatprep.subr.bf16.mxu0 0
        %1413 = vmatpush2.bf16.msra.mxu0 0
        %1414 = vmatprep.mubr.bf16.mxu0 0
        %1415 = vmatmul.mubr.bf16.gmra.mxu0 %v1374
        %v1416 = vpop.f32.mrf.mxu0
        %v1417 = vadd.f32 0.0, %v1416
        %v1418 = vpop.f32.mrf.mxu0
        %v1419 = vadd.f32 0.0, %v1418
        %v1420 = vpop.f32.mrf.mxu0
        %v1421 = vpop.f32.mrf.mxu0
        %1422 = vdwg.mxu0
        %v1423 = vadd.f32 %v1366, %v1417
        %v1424 = vadd.f32 %v1367, %v1419
        %v1425 = vsel %vm228, %v1306, %v1296
        %s1426 = scalar_lea.vmem %s2, 16
        %v1427 = vld [vmem:[%s1426] sm:$0x3]
        %v1429 = vcombine.high %v1425, %v1425
        %v1431 = vpack.c.bf16 %v1425, %v1425
        %v1432 = vpack.c.bf16 %v1429, %v1429
        %v1434 = vsel %vm293, %v1427, 0
        %v1437 = vsel %vm297, %v1431, 0
        %v1440 = vsel %vm297, %v1432, 0
        %1442 = vmatprep.subr.bf16.mxu0 0
        %1443 = vmatpush1.bf16.msra.mxu0 0
        %1444 = vmatprep.subr.bf16.mxu0 0
        %1445 = vmatpush1.bf16.msra.mxu0 0
        %1446 = vmatprep.subr.bf16.mxu0 0
        %1447 = vmatpush1.bf16.msra.mxu0 0
        %1448 = vmatprep.subr.bf16.mxu0 0
        %1449 = vmatpush1.bf16.msra.mxu0 0
        %1450 = vmatprep.subr.bf16.mxu0 0
        %1451 = vmatpush1.bf16.msra.mxu0 0
        %1452 = vmatprep.subr.bf16.mxu0 0
        %1453 = vmatpush1.bf16.msra.mxu0 0
        %1454 = vmatprep.subr.bf16.mxu0 0
        %1455 = vmatpush1.bf16.msra.mxu0 0
        %1456 = vmatprep.subr.bf16.mxu0 %v1440
        %1457 = vmatpush1.bf16.msra.mxu0 %v1437
        %1458 = vmatprep.subr.bf16.mxu0 0
        %1459 = vmatpush2.bf16.msra.mxu0 0
        %1460 = vmatprep.subr.bf16.mxu0 0
        %1461 = vmatpush2.bf16.msra.mxu0 0
        %1462 = vmatprep.subr.bf16.mxu0 0
        %1463 = vmatpush2.bf16.msra.mxu0 0
        %1464 = vmatprep.subr.bf16.mxu0 0
        %1465 = vmatpush2.bf16.msra.mxu0 0
        %1466 = vmatprep.subr.bf16.mxu0 0
        %1467 = vmatpush2.bf16.msra.mxu0 0
        %1468 = vmatprep.subr.bf16.mxu0 0
        %1469 = vmatpush2.bf16.msra.mxu0 0
        %1470 = vmatprep.subr.bf16.mxu0 0
        %1471 = vmatpush2.bf16.msra.mxu0 0
        %1472 = vmatprep.subr.bf16.mxu0 0
        %1473 = vmatpush2.bf16.msra.mxu0 0
        %1474 = vmatprep.mubr.bf16.mxu0 0
        %1475 = vmatmul.mubr.bf16.gmra.mxu0 %v1434
        %v1476 = vpop.f32.mrf.mxu0
        %v1477 = vadd.f32 0.0, %v1476
        %v1478 = vpop.f32.mrf.mxu0
        %v1479 = vadd.f32 0.0, %v1478
        %v1480 = vpop.f32.mrf.mxu0
        %v1481 = vpop.f32.mrf.mxu0
        %1482 = vdwg.mxu0
        %v1483 = vadd.f32 %v1423, %v1477
        %v1484 = vadd.f32 %v1424, %v1479
        %v1485 = vsel %vm240, %v1483, 0.0
        %v1486 = vsel %vm240, %v1484, 0.0
        %v1487 = vadd.f32 %v1485, %v1486
        %1488 = vadd.xlane.f32.xlu0 %v1487
        %v1489 = vpop.xlane.xlu0 %1488
        %v1490 = vmul.f32 %v1489, 0.00390625
        %v1491 = vmul.f32 %v1483, %v1483
        %v1492 = vmul.f32 %v1484, %v1484
        %v1493 = vsel %vm240, %v1491, 0.0
        %v1494 = vsel %vm240, %v1492, 0.0
        %v1495 = vadd.f32 %v1493, %v1494
        %1496 = vadd.xlane.f32.xlu0 %v1495
        %v1497 = vpop.xlane.xlu0 %1496
        %v1498 = vmul.f32 %v1497, 0.00390625
        %v1499 = vmul.f32 %v1490, %v1490
        %v1500 = vsub.f32 %v1498, %v1499
        %v1501 = vsub.f32 %v1483, %v1490
        %v1502 = vsub.f32 %v1484, %v1490
        %v1503 = vadd.f32 %v1500, 1e-05
        %v1504 = vrsqrt.pop %v1503
        %v1505 = vmul.f32 %v1501, %v1504
        %v1506 = vmul.f32 %v1502, %v1504
        %v1509 = vcombine.low %v1505, %v1506
        %v1511 = vadd.f32 %v224, %v1509
        %1512 = vst [vmem:[%s217] sm:$0xff] %v1511
        %s1513 = sand.u32 %s137, 1
        %s1514 = scalar_lea.sflag [#allocation3], %s1513
        %s1515 = sand.u32 %s137, 1
        %s1516 = smul.addr %s1515, 8
        %s1517 = scalar_lea.vmem [#allocation2], %s1516
        // Predicated region
        $region41: #{tpu_custom_call.1} parent=39 // pred_check
          %p1518 = pneg %p147
        $region42: #{tpu_custom_call.1} parent=39 // pred_check_branch
          %1520 = sbr.rel (%p1518) target = $region44
        $region43: #{tpu_custom_call.1} parent=39 // pred_region
          %s1522 = ssub.s32 128, 128
          %1523 = vsyncadd %s1514, %s1522
          %s1524 = smul.addr %s19, 2
          %s1525 = smul.addr %s1524, 64
          %s1526 = scalar_lea.hbm %s5, %s1525
          %s1528 = sshll.u32 %s1517, 4
          %s1529 = int_to_ptr.vmem [resolvable:$true] %s1528
          %1531 = dma.vmem_to_hbm [thread:$0]  %s1529, 128, %s1526, %s1514
        $region44: #{tpu_custom_call.1} parent=39 // pred_fallthru
          _
      $region40: #{tpu_custom_call.1} parent=5 // pred_fallthru
        _
      %p1532 = scmp.le.s32.totalorder 2, %s14
      // Predicated region
      $region45: #{tpu_custom_call.1} parent=5 // pred_check
        %p1533 = pneg %p1532
      $region46: #{tpu_custom_call.1} parent=5 // pred_check_branch
        %1535 = sbr.rel (%p1533) target = $region48
      $region47: #{tpu_custom_call.1} parent=5 // pred_region
        %s1536 = ssub.s32 %s14, 2
        // Predicated region
        $region49: #{tpu_custom_call.1} parent=47 // pred_check
          %p1537 = pneg %p153
        $region50: #{tpu_custom_call.1} parent=47 // pred_check_branch
          %1539 = sbr.rel (%p1537) target = $region52
        $region51: #{tpu_custom_call.1} parent=47 // pred_region
          %s1540 = sand.u32 %s138, 1
          %s1541 = scalar_lea.sflag [#allocation3], %s1540
          %s1542 = sand.u32 %s138, 1
          %s1543 = smul.addr %s1542, 8
          %s1544 = scalar_lea.vmem [#allocation2], %s1543
          %1545 = dma.done %s1541, 128
        $region52: #{tpu_custom_call.1} parent=47 // pred_fallthru
          _
      $region48: #{tpu_custom_call.1} parent=5 // pred_fallthru
        _
    $region6: #{tpu_custom_call.1} parent=1 // loop_footer
      %s18 = sadd.s32 1, %s14
    $region7: #{tpu_custom_call.1} parent=1 // loop_footer_branch
      %13 = sbr.rel target = $region3
    $region8: #{tpu_custom_call.1} parent=1 // loop_exit
      _
    %1546 = vsyncpa [#allocation3], 1
    %s1547 = scalar_lea.sflag [#allocation3], 1
    %1548 = vsyncpa %s1547, 1

</llo_original>
